<compile_context>
chip_gen: v7x
topology: tpu7x:2x2x1
jax: 0.10.0
libtpu: 0.0.40
codegen_flags: <defaults>
</compile_context>

<pallas_src>
import jax
import jax.numpy as jnp
from jax import lax
from jax.experimental import pallas as pl
from jax.experimental.pallas import tpu as pltpu


def attention_kernel(lh_ref, colwa_ref, enc_ref, ua_ref, va_ref, out_ref):
    # lh_ref   : (B, H)    last_hidden
    # colwa_ref: (B, 1)    colsum(Wa.weight) over the out dim (parameter-only precompute)
    # enc_ref  : (B*T, H)  encoder_outputs flattened over (batch, time) -- no HBM transpose
    # ua_ref   : (H, H)    Ua.weight  (PyTorch Linear convention: (out, in))
    # va_ref   : (1, H)    va as a row vector
    # out_ref  : (B, 1, T) attention weights, T on the lane axis
    B, H = lh_ref.shape
    T = out_ref.shape[2]
    f32 = jnp.float32

    # ---- s[t] = Wa(last_hidden^T).sum(1)[t] = sum_b last_hidden[b,t]*colsum(Wa)[b] ----
    # One tiny (T,B)x(B,1) matvec (O(B*T) MACs) replacing the former 2*H^3 MXU burn.
    # Result is (T, 1): t on sublanes, exactly what the tanh broadcast below wants.
    s_col = lax.dot_general(
        lh_ref[...], colwa_ref[...], (((0,), (0,)), ((), ())),
        preferred_element_type=f32)                       # (T, 1)

    # ---- Ua(encoder_outputs): ONE fused matmul over all B*T rows -------------------
    # Contract the minor dims of both operands (x @ W^T), i.e. the torch Linear.
    # At scale: feed bf16 operands here (keep preferred_element_type=f32).
    u2 = lax.dot_general(
        enc_ref[...], ua_ref[...], (((1,), (1,)), ((), ())),
        preferred_element_type=f32)                       # (B*T, H)
    # Leading-dim split lands on (8,128) tile boundaries because T % 8 == 0 (f32),
    # so this reshape is a free vreg regrouping, not a VMEM copy.
    u3 = u2.reshape(B, T, H)

    # ---- tanh(s[t] + Ua(enc)[b,t,h])  (the torch broadcast; needs T == H) ----------
    # The (T,1) -> (B,T,H) broadcast is VPU work; tanh goes to the EUP.
    e3 = jnp.tanh(u3 + s_col)                             # (B, T, H)

    # ---- energies[b, t] = sum_h va[h] * e[b, t, h] ----------------------------------
    # Batched contraction (flash-attn 'bqd,bkd->bqk' class) whose result lands with
    # T on the lane axis, so the softmax reduces over lanes.
    va3 = jnp.broadcast_to(va_ref[...].reshape(1, 1, H), (B, 1, H))
    energies = lax.dot_general(
        va3, e3, (((2,), (2,)), ((0,), (0,))),
        preferred_element_type=f32)                       # (B, 1, T)

    # ---- softmax over T (lane axis) --------------------------------------------------
    m = jnp.max(energies, axis=-1, keepdims=True)         # (B, 1, 1)
    p = jnp.exp(energies - m)                             # EUP exp
    denom = jnp.sum(p, axis=-1, keepdims=True)            # (B, 1, 1), >= 1 (includes exp(0))
    inv = pl.reciprocal(denom, approx=True)               # EUP approximate reciprocal
    inv = inv * (2.0 - denom * inv)                       # one Newton step -> ~f32 accuracy
    out_ref[...] = p * inv                                # whole-output store


def attention_pallas(last_hidden, encoder_outputs, wa, ua, va):
    B, T, H = encoder_outputs.shape
    assert last_hidden.shape == (B, H)
    # The original torch module only runs with batch == hidden (Wa(last_hidden.T))
    # and max_time == hidden (the (H,1) + (B,T,H) broadcast).
    assert B == H and T == H, "original module only runs with batch == max_time == hidden"

    # Parameter-only precompute (review): the forward only ever uses Wa through
    # colsum(Wa) = Wa.weight.sum(axis=0); in a real model this is computed once per
    # parameter update, and it removes an H^2 input DMA from every call.
    colwa = jnp.sum(wa, axis=0).reshape(B, 1)

    enc2d = encoder_outputs.reshape(B * T, H)   # free contiguous reshape, NO transpose copy
    va_row = va.reshape(1, H)

    # Advisory cost estimate so XLA schedules the custom call correctly.
    flops = 2 * B * T * H * H + 2 * B * T + 2 * B * T * H
    transcendentals = B * T * H + B * T + B
    bytes_accessed = 4 * (B * H + B + B * T * H + H * H + H + B * T)

    vmem = pltpu.MemorySpace.VMEM
    out = pl.pallas_call(
        attention_kernel,
        out_shape=jax.ShapeDtypeStruct((B, 1, T), jnp.float32),
        in_specs=[
            pl.BlockSpec(memory_space=vmem),    # last_hidden      (B, H)
            pl.BlockSpec(memory_space=vmem),    # colsum(Wa)       (B, 1)
            pl.BlockSpec(memory_space=vmem),    # encoder_outputs  (B*T, H)
            pl.BlockSpec(memory_space=vmem),    # Ua.weight        (H, H)
            pl.BlockSpec(memory_space=vmem),    # va               (1, H)
        ],
        out_specs=pl.BlockSpec(memory_space=vmem),
        cost_estimate=pl.CostEstimate(
            flops=flops, transcendentals=transcendentals, bytes_accessed=bytes_accessed),
        # Single invocation: no grid.  At scaled shapes: add a leading "parallel"
        # batch/row grid axis (v7x: 2 TensorCores, size tiles for 64 MiB VMEM),
        # give Ua/va index_maps that return the same block every step (resident
        # weights), tile rows/T/H in multiples of 128 (v5e) / 256 (v6e/v7x) with
        # bf16 matmul operands + f32 accumulation, raise vmem_limit_bytes via
        # pltpu.CompilerParams, and write a lane-dense (B, T) output block.
        # At this toy size all of that is pure overhead.
    )(last_hidden, colwa, enc2d, ua, va_row)
    return out.reshape(B, T)                    # free metadata reshape in HBM


def attention_reference(last_hidden, encoder_outputs, wa, ua, va):
    # Pure-JAX mirror of the PyTorch forward.
    x = last_hidden.T                                   # (H, B)
    s = jnp.sum(x @ wa.T, axis=1, keepdims=True)        # (H, 1)
    u = encoder_outputs @ ua.T                          # (B, T, H)
    out = jnp.tanh(s + u)                               # (B, T, H)  (broadcast as in torch)
    energies = out @ va                                 # (B, T)
    return jax.nn.softmax(energies, axis=-1)


if __name__ == "__main__":
    H = 16
    B = H   # required by last_hidden.transpose(0, 1) feeding Wa
    T = H   # required by the (H,1) + (B,T,H) broadcast

    key = jax.random.PRNGKey(0)
    k1, k2, k3, k4, k5 = jax.random.split(key, 5)

    last_hidden = jax.random.normal(k1, (B, H), jnp.float32)
    encoder_outputs = jax.random.normal(k2, (B, T, H), jnp.float32)

    # Deterministic parameter init (Linear-style uniform for Wa/Ua, normal for va).
    bound = 1.0 / (H ** 0.5)
    wa = jax.random.uniform(k3, (H, H), jnp.float32, -bound, bound)  # Wa.weight (out, in)
    ua = jax.random.uniform(k4, (H, H), jnp.float32, -bound, bound)  # Ua.weight (out, in)
    va = jax.random.normal(k5, (H,), jnp.float32)                    # va ~ N(0, 1)

    attn = attention_pallas(last_hidden, encoder_outputs, wa, ua, va)
    jax.block_until_ready(attn)

    ref = attention_reference(last_hidden, encoder_outputs, wa, ua, va)
    assert attn.shape == (B, T)
    err = float(jnp.max(jnp.abs(attn - ref)))
    assert jnp.allclose(attn, ref, atol=1e-4, rtol=1e-4), f"max abs err {err}"

    print("KERNEL_OK")
</pallas_src>

<mosaic_0001>
module attributes {stable_mosaic.version = 11 : i64} {
  func.func @attention_kernel(%arg0: memref<16x16xf32, #tpu.memory_space<vmem>>, %arg1: memref<16x1xf32, #tpu.memory_space<vmem>>, %arg2: memref<256x16xf32, #tpu.memory_space<vmem>>, %arg3: memref<16x16xf32, #tpu.memory_space<vmem>>, %arg4: memref<1x16xf32, #tpu.memory_space<vmem>>, %arg5: memref<16x1x16xf32, #tpu.memory_space<vmem>>) attributes {dimension_semantics = [], scalar_prefetch = 0 : i64, scratch_operands = 0 : i64, tpu.core_type = #tpu.core_type<tc>} {
    %c0 = arith.constant 0 : index
    %c0_0 = arith.constant 0 : index
    %0 = vector.load %arg0[%c0, %c0_0] : memref<16x16xf32, #tpu.memory_space<vmem>>, vector<16x16xf32>
    %c0_1 = arith.constant 0 : index
    %c0_2 = arith.constant 0 : index
    %1 = vector.load %arg1[%c0_1, %c0_2] : memref<16x1xf32, #tpu.memory_space<vmem>>, vector<16x1xf32>
    %cst = arith.constant dense<0.000000e+00> : vector<16x1xf32>
    %2 = tpu.matmul %0, %1, %cst {dimension_numbers = #tpu.dot_dimension_numbers<[0], [0], [1], [1], [0, 1, 1, 1], [], []>} : vector<16x16xf32>, vector<16x1xf32>, vector<16x1xf32> -> vector<16x1xf32>
    %c0_3 = arith.constant 0 : index
    %c0_4 = arith.constant 0 : index
    %3 = vector.load %arg2[%c0_3, %c0_4] : memref<256x16xf32, #tpu.memory_space<vmem>>, vector<256x16xf32>
    %c0_5 = arith.constant 0 : index
    %c0_6 = arith.constant 0 : index
    %4 = vector.load %arg3[%c0_5, %c0_6] : memref<16x16xf32, #tpu.memory_space<vmem>>, vector<16x16xf32>
    %cst_7 = arith.constant dense<0.000000e+00> : vector<256x16xf32>
    %5 = tpu.matmul %3, %4, %cst_7 {dimension_numbers = #tpu.dot_dimension_numbers<[1], [1], [0], [0], [0, 0, 1, 0], [], []>} : vector<256x16xf32>, vector<16x16xf32>, vector<256x16xf32> -> vector<256x16xf32>
    %6 = vector.shape_cast %5 : vector<256x16xf32> to vector<16x16x16xf32>
    %7 = vector.shape_cast %2 : vector<16x1xf32> to vector<1x16x1xf32>
    %8 = vector.broadcast %7 : vector<1x16x1xf32> to vector<16x16x16xf32>
    %9 = arith.addf %6, %8 : vector<16x16x16xf32>
    %10 = math.tanh %9 : vector<16x16x16xf32>
    %c0_8 = arith.constant 0 : index
    %c0_9 = arith.constant 0 : index
    %11 = vector.load %arg4[%c0_8, %c0_9] : memref<1x16xf32, #tpu.memory_space<vmem>>, vector<1x16xf32>
    %12 = vector.shape_cast %11 : vector<1x16xf32> to vector<1x1x16xf32>
    %13 = vector.shape_cast %12 : vector<1x1x16xf32> to vector<1x1x16xf32>
    %14 = vector.broadcast %13 : vector<1x1x16xf32> to vector<16x1x16xf32>
    %cst_10 = arith.constant dense<0.000000e+00> : vector<16x1x16xf32>
    %15 = tpu.matmul %14, %10, %cst_10 {dimension_numbers = #tpu.dot_dimension_numbers<[2], [2], [1], [1], [0, 0, 0, 1, 1, 1], [0], [0]>} : vector<16x1x16xf32>, vector<16x16x16xf32>, vector<16x1x16xf32> -> vector<16x1x16xf32>
    %cst_11 = arith.constant dense<0xFF800000> : vector<16x1xf32>
    %16 = vector.multi_reduction <maximumf>, %15, %cst_11 [2] : vector<16x1x16xf32> to vector<16x1xf32>
    %17 = vector.shape_cast %16 : vector<16x1xf32> to vector<16x1x1xf32>
    %18 = vector.broadcast %17 : vector<16x1x1xf32> to vector<16x1x16xf32>
    %19 = arith.subf %15, %18 : vector<16x1x16xf32>
    %20 = math.exp %19 : vector<16x1x16xf32>
    %cst_12 = arith.constant dense<0.000000e+00> : vector<16x1xf32>
    %21 = vector.multi_reduction <add>, %20, %cst_12 [2] : vector<16x1x16xf32> to vector<16x1xf32>
    %22 = vector.shape_cast %21 : vector<16x1xf32> to vector<16x1x1xf32>
    %23 = tpu.reciprocal %22 {approx = true} : vector<16x1x1xf32> -> vector<16x1x1xf32>
    %24 = arith.mulf %22, %23 : vector<16x1x1xf32>
    %cst_13 = arith.constant 2.000000e+00 : f32
    %25 = vector.broadcast %cst_13 : f32 to vector<16x1x1xf32>
    %26 = arith.subf %25, %24 : vector<16x1x1xf32>
    %27 = arith.mulf %23, %26 : vector<16x1x1xf32>
    %28 = vector.broadcast %27 : vector<16x1x1xf32> to vector<16x1x16xf32>
    %29 = arith.mulf %20, %28 : vector<16x1x16xf32>
    %c0_14 = arith.constant 0 : index
    %c0_15 = arith.constant 0 : index
    %c0_16 = arith.constant 0 : index
    %30 = vector.load %arg5[%c0_14, %c0_15, %c0_16] : memref<16x1x16xf32, #tpu.memory_space<vmem>>, vector<16x1x16xf32>
    tpu.vector_store %arg5[%c0_14, %c0_15, %c0_16], %29 {strides = array<i32>} : memref<16x1x16xf32, #tpu.memory_space<vmem>>, vector<16x1x16xf32>,
    return
  }
}

</mosaic_0001>

<llo_original>
// kernel: tpu_custom_call.1
$region0: #{tpu_custom_call.1}
  #allocation0 [shape = 'u32[]', space=smem, size = 0x4, offset = 0x4, fixed_abs, tag = 'smem constant byte address 0x4 - core index']
  #allocation1 [shape = 'u32[144,128]{1,0:T(1,128)}', space=vmem, size = 0x12000, scoped, tag = 'internal scratch']
  %s0 = inlined_call_operand.vmem [shape: f32[16,16], index: 0, kind: input, shape index: {}]
  %s1 = inlined_call_operand.vmem [shape: f32[16,1], index: 1, kind: input, shape index: {}]
  %s2 = inlined_call_operand.vmem [shape: f32[256,16], index: 2, kind: input, shape index: {}]
  %s3 = inlined_call_operand.vmem [shape: f32[16,16], index: 3, kind: input, shape index: {}]
  %s4 = inlined_call_operand.vmem [shape: f32[1,16], index: 4, kind: input, shape index: {}]
  %s5 = inlined_call_operand.hbm [shape: f32[16,1,16], index: 5, kind: output, shape index: {}]
  %s6 = sld [smem:[#allocation0]]
  $region30: #{tpu_custom_call.1} parent=0
    _
  %s8 = ssub.s32 1, %s6
  %s9 = scalar_select 0, %s8, %s6
  $region1: #{tpu_custom_call.1} parent=0
    #allocation2 [shape = 'u8[8192]{0}', space=vmem, size = 0x2000, scoped, tag = 'output window, operand 0, single buffered']
    #allocation3 [shape = 's32[1]{0}', space=sflag, size = 0x4, scoped, tag = 'scoped memory for tpu_custom_call.1']
    %10 = vsyncpa [#allocation3], 0
    // Predicated region
    $region2: #{tpu_custom_call.1} parent=1 // pred_check
      _
    $region3: #{tpu_custom_call.1} parent=1 // pred_check_branch
      %12 = sbr.rel (0) target = $region5
    $region4: #{tpu_custom_call.1} parent=1 // pred_region
      _
    $region5: #{tpu_custom_call.1} parent=1 // pred_fallthru
      _
    // Predicated region
    $region6: #{tpu_custom_call.1} parent=1 // pred_check
      _
    $region7: #{tpu_custom_call.1} parent=1 // pred_check_branch
      %14 = sbr.rel (0) target = $region9
    $region8: #{tpu_custom_call.1} parent=1 // pred_region
      _
    $region9: #{tpu_custom_call.1} parent=1 // pred_fallthru
      _
    // Predicated region
    $region10: #{tpu_custom_call.1} parent=1 // pred_check
      _
    $region11: #{tpu_custom_call.1} parent=1 // pred_check_branch
      %16 = sbr.rel (0) target = $region13
    $region12: #{tpu_custom_call.1} parent=1 // pred_region
      _
    $region13: #{tpu_custom_call.1} parent=1 // pred_fallthru
      _
    // Predicated region
    $region14: #{tpu_custom_call.1} parent=1 // pred_check
      _
    $region15: #{tpu_custom_call.1} parent=1 // pred_check_branch
      %18 = sbr.rel (0) target = $region17
    $region16: #{tpu_custom_call.1} parent=1 // pred_region
      _
    $region17: #{tpu_custom_call.1} parent=1 // pred_fallthru
      _
    // Predicated region
    $region18: #{tpu_custom_call.1} parent=1 // pred_check
      _
    $region19: #{tpu_custom_call.1} parent=1 // pred_check_branch
      %20 = sbr.rel (0) target = $region21
    $region20: #{tpu_custom_call.1} parent=1 // pred_region
      _
    $region21: #{tpu_custom_call.1} parent=1 // pred_fallthru
      _
    %v21 = vld [vmem:[%s0] sm:$0xff]
    %v22 = vld [vmem:[%s0 + $0x8] sm:$0xff]
    %v23 = vld [vmem:[%s1] sm:$0xff]
    %v24 = vld [vmem:[%s1 + $0x8] sm:$0xff]
    %25 = vxpose.xlu0.b32.start [1/16] %v21, 128
    %26 = vxpose.xlu0.b32.cont [2/16] %v22, 128
    %27 = vxpose.xlu0.b32.cont [3/16] 0.0, 128
    %28 = vxpose.xlu0.b32.cont [4/16] 0.0, 128
    %29 = vxpose.xlu0.b32.cont [5/16] 0.0, 128
    %30 = vxpose.xlu0.b32.cont [6/16] 0.0, 128
    %31 = vxpose.xlu0.b32.cont [7/16] 0.0, 128
    %32 = vxpose.xlu0.b32.cont [8/16] 0.0, 128
    %33 = vxpose.xlu0.b32.cont [9/16] 0.0, 128
    %34 = vxpose.xlu0.b32.cont [10/16] 0.0, 128
    %35 = vxpose.xlu0.b32.cont [11/16] 0.0, 128
    %36 = vxpose.xlu0.b32.cont [12/16] 0.0, 128
    %37 = vxpose.xlu0.b32.cont [13/16] 0.0, 128
    %38 = vxpose.xlu0.b32.cont [14/16] 0.0, 128
    %39 = vxpose.xlu0.b32.cont [15/16] 0.0, 128
    %40 = vxpose.xlu0.b32.end [16/16] 0.0, 128
    %v41 = vpop.trf.xlu0
    %v42 = vpop.trf.xlu0
    %v43 = vpop.trf.xlu0
    %v44 = vpop.trf.xlu0
    %v45 = vpop.trf.xlu0
    %v46 = vpop.trf.xlu0
    %v47 = vpop.trf.xlu0
    %v48 = vpop.trf.xlu0
    %v49 = vpop.trf.xlu0
    %v50 = vpop.trf.xlu0
    %v51 = vpop.trf.xlu0
    %v52 = vpop.trf.xlu0
    %v53 = vpop.trf.xlu0
    %v54 = vpop.trf.xlu0
    %v55 = vpop.trf.xlu0
    %v56 = vpop.trf.xlu0
    %vm57 = vcmask 130048
    %v59 = vsel %vm57, %v41, 0
    %v62 = vsel %vm57, %v42, 0
    %64 = vmatprep.subr.mxu0 0.0
    %65 = vmatpush1.msra.mxu0 %v23
    %66 = vmatprep.subr.mxu0 0.0
    %67 = vmatpush1.msra.mxu0 %v24
    %68 = vmatprep.subr.mxu0 0.0
    %69 = vmatpush1.msra.mxu0 0.0
    %70 = vmatprep.subr.mxu0 0.0
    %71 = vmatpush1.msra.mxu0 0.0
    %72 = vmatprep.subr.mxu0 0.0
    %73 = vmatpush1.msra.mxu0 0.0
    %74 = vmatprep.subr.mxu0 0.0
    %75 = vmatpush1.msra.mxu0 0.0
    %76 = vmatprep.subr.mxu0 0.0
    %77 = vmatpush1.msra.mxu0 0.0
    %78 = vmatprep.subr.mxu0 0.0
    %79 = vmatpush1.msra.mxu0 0.0
    %80 = vmatprep.subr.mxu0 0.0
    %81 = vmatpush1.msra.mxu0 0.0
    %82 = vmatprep.subr.mxu0 0.0
    %83 = vmatpush1.msra.mxu0 0.0
    %84 = vmatprep.subr.mxu0 0.0
    %85 = vmatpush1.msra.mxu0 0.0
    %86 = vmatprep.subr.mxu0 0.0
    %87 = vmatpush1.msra.mxu0 0.0
    %88 = vmatprep.subr.mxu0 0.0
    %89 = vmatpush1.msra.mxu0 0.0
    %90 = vmatprep.subr.mxu0 0.0
    %91 = vmatpush1.msra.mxu0 0.0
    %92 = vmatprep.subr.mxu0 0.0
    %93 = vmatpush1.msra.mxu0 0.0
    %94 = vmatprep.subr.mxu0 0.0
    %95 = vmatpush1.msra.mxu0 0.0
    %96 = vmatprep.subr.mxu0 0.0
    %97 = vmatpush1.msra.mxu0 0.0
    %98 = vmatprep.subr.mxu0 0.0
    %99 = vmatpush1.msra.mxu0 0.0
    %100 = vmatprep.subr.mxu0 0.0
    %101 = vmatpush1.msra.mxu0 0.0
    %102 = vmatprep.subr.mxu0 0.0
    %103 = vmatpush1.msra.mxu0 0.0
    %104 = vmatprep.subr.mxu0 0.0
    %105 = vmatpush1.msra.mxu0 0.0
    %106 = vmatprep.subr.mxu0 0.0
    %107 = vmatpush1.msra.mxu0 0.0
    %108 = vmatprep.subr.mxu0 0.0
    %109 = vmatpush1.msra.mxu0 0.0
    %110 = vmatprep.subr.mxu0 0.0
    %111 = vmatpush1.msra.mxu0 0.0
    %112 = vmatprep.subr.mxu0 0.0
    %113 = vmatpush1.msra.mxu0 0.0
    %114 = vmatprep.subr.mxu0 0.0
    %115 = vmatpush1.msra.mxu0 0.0
    %116 = vmatprep.subr.mxu0 0.0
    %117 = vmatpush1.msra.mxu0 0.0
    %118 = vmatprep.subr.mxu0 0.0
    %119 = vmatpush1.msra.mxu0 0.0
    %120 = vmatprep.subr.mxu0 0.0
    %121 = vmatpush1.msra.mxu0 0.0
    %122 = vmatprep.subr.mxu0 0.0
    %123 = vmatpush1.msra.mxu0 0.0
    %124 = vmatprep.subr.mxu0 0.0
    %125 = vmatpush1.msra.mxu0 0.0
    %126 = vmatprep.subr.mxu0 0.0
    %127 = vmatpush1.msra.mxu0 0.0
    %128 = vmatprep.mubr.f32.mxu0 0.0
    %129 = vmatmul.mubr.f32.gmra.mrb[0].mxu0 %v59
    %v130 = vpop.f32.mrb[0].mxu0
    %v131 = vadd.f32 0.0, %v130
    %v132 = vpop.f32.mrb[0].mxu0
    %133 = vmatprep.mubr.f32.mxu0 0.0
    %134 = vmatmul.mubr.f32.gmra.mrb[0].mxu0 %v62
    %v135 = vpop.f32.mrb[0].mxu0
    %v136 = vadd.f32 0.0, %v135
    %v137 = vpop.f32.mrb[0].mxu0
    %138 = vdwg.mxu0
    %v139 = vld [vmem:[%s2] sm:$0xff]
    %v140 = vld [vmem:[%s2 + $0x8] sm:$0xff]
    %v141 = vld [vmem:[%s2 + $0x10] sm:$0xff]
    %v142 = vld [vmem:[%s2 + $0x18] sm:$0xff]
    %v143 = vld [vmem:[%s2 + $0x20] sm:$0xff]
    %v144 = vld [vmem:[%s2 + $0x28] sm:$0xff]
    %v145 = vld [vmem:[%s2 + $0x30] sm:$0xff]
    %v146 = vld [vmem:[%s2 + $0x38] sm:$0xff]
    %v147 = vld [vmem:[%s2 + $0x40] sm:$0xff]
    %v148 = vld [vmem:[%s2 + $0x48] sm:$0xff]
    %v149 = vld [vmem:[%s2 + $0x50] sm:$0xff]
    %v150 = vld [vmem:[%s2 + $0x58] sm:$0xff]
    %v151 = vld [vmem:[%s2 + $0x60] sm:$0xff]
    %v152 = vld [vmem:[%s2 + $0x68] sm:$0xff]
    %v153 = vld [vmem:[%s2 + $0x70] sm:$0xff]
    %v154 = vld [vmem:[%s2 + $0x78] sm:$0xff]
    %v155 = vld [vmem:[%s2 + $0x80] sm:$0xff]
    %v156 = vld [vmem:[%s2 + $0x88] sm:$0xff]
    %v157 = vld [vmem:[%s2 + $0x90] sm:$0xff]
    %v158 = vld [vmem:[%s2 + $0x98] sm:$0xff]
    %v159 = vld [vmem:[%s2 + $0xa0] sm:$0xff]
    %v160 = vld [vmem:[%s2 + $0xa8] sm:$0xff]
    %v161 = vld [vmem:[%s2 + $0xb0] sm:$0xff]
    %v162 = vld [vmem:[%s2 + $0xb8] sm:$0xff]
    %v163 = vld [vmem:[%s2 + $0xc0] sm:$0xff]
    %v164 = vld [vmem:[%s2 + $0xc8] sm:$0xff]
    %v165 = vld [vmem:[%s2 + $0xd0] sm:$0xff]
    %v166 = vld [vmem:[%s2 + $0xd8] sm:$0xff]
    %v167 = vld [vmem:[%s2 + $0xe0] sm:$0xff]
    %v168 = vld [vmem:[%s2 + $0xe8] sm:$0xff]
    %v169 = vld [vmem:[%s2 + $0xf0] sm:$0xff]
    %v170 = vld [vmem:[%s2 + $0xf8] sm:$0xff]
    %v171 = vld [vmem:[%s3] sm:$0xff]
    %v172 = vld [vmem:[%s3 + $0x8] sm:$0xff]
    %v174 = vsel %vm57, %v139, 0
    %v177 = vsel %vm57, %v140, 0
    %v180 = vsel %vm57, %v141, 0
    %v183 = vsel %vm57, %v142, 0
    %v186 = vsel %vm57, %v143, 0
    %v189 = vsel %vm57, %v144, 0
    %v192 = vsel %vm57, %v145, 0
    %v195 = vsel %vm57, %v146, 0
    %v198 = vsel %vm57, %v147, 0
    %v201 = vsel %vm57, %v148, 0
    %v204 = vsel %vm57, %v149, 0
    %v207 = vsel %vm57, %v150, 0
    %v210 = vsel %vm57, %v151, 0
    %v213 = vsel %vm57, %v152, 0
    %v216 = vsel %vm57, %v153, 0
    %v219 = vsel %vm57, %v154, 0
    %v222 = vsel %vm57, %v155, 0
    %v225 = vsel %vm57, %v156, 0
    %v228 = vsel %vm57, %v157, 0
    %v231 = vsel %vm57, %v158, 0
    %v234 = vsel %vm57, %v159, 0
    %v237 = vsel %vm57, %v160, 0
    %v240 = vsel %vm57, %v161, 0
    %v243 = vsel %vm57, %v162, 0
    %v246 = vsel %vm57, %v163, 0
    %v249 = vsel %vm57, %v164, 0
    %v252 = vsel %vm57, %v165, 0
    %v255 = vsel %vm57, %v166, 0
    %v258 = vsel %vm57, %v167, 0
    %v261 = vsel %vm57, %v168, 0
    %v264 = vsel %vm57, %v169, 0
    %v267 = vsel %vm57, %v170, 0
    %v270 = vsel %vm57, %v171, 0
    %v273 = vsel %vm57, %v172, 0
    %275 = vmatprep.subr.mxu0 0.0
    %276 = vmatpush1.xpose.msra.mxu0 %v270
    %277 = vmatprep.subr.mxu0 0.0
    %278 = vmatpush1.xpose.msra.mxu0 %v273
    %279 = vmatprep.subr.mxu0 0.0
    %280 = vmatpush1.xpose.msra.mxu0 0.0
    %281 = vmatprep.subr.mxu0 0.0
    %282 = vmatpush1.xpose.msra.mxu0 0.0
    %283 = vmatprep.subr.mxu0 0.0
    %284 = vmatpush1.xpose.msra.mxu0 0.0
    %285 = vmatprep.subr.mxu0 0.0
    %286 = vmatpush1.xpose.msra.mxu0 0.0
    %287 = vmatprep.subr.mxu0 0.0
    %288 = vmatpush1.xpose.msra.mxu0 0.0
    %289 = vmatprep.subr.mxu0 0.0
    %290 = vmatpush1.xpose.msra.mxu0 0.0
    %291 = vmatprep.subr.mxu0 0.0
    %292 = vmatpush1.xpose.msra.mxu0 0.0
    %293 = vmatprep.subr.mxu0 0.0
    %294 = vmatpush1.xpose.msra.mxu0 0.0
    %295 = vmatprep.subr.mxu0 0.0
    %296 = vmatpush1.xpose.msra.mxu0 0.0
    %297 = vmatprep.subr.mxu0 0.0
    %298 = vmatpush1.xpose.msra.mxu0 0.0
    %299 = vmatprep.subr.mxu0 0.0
    %300 = vmatpush1.xpose.msra.mxu0 0.0
    %301 = vmatprep.subr.mxu0 0.0
    %302 = vmatpush1.xpose.msra.mxu0 0.0
    %303 = vmatprep.subr.mxu0 0.0
    %304 = vmatpush1.xpose.msra.mxu0 0.0
    %305 = vmatprep.subr.mxu0 0.0
    %306 = vmatpush1.xpose.msra.mxu0 0.0
    %307 = vmatprep.subr.mxu0 0.0
    %308 = vmatpush1.xpose.msra.mxu0 0.0
    %309 = vmatprep.subr.mxu0 0.0
    %310 = vmatpush1.xpose.msra.mxu0 0.0
    %311 = vmatprep.subr.mxu0 0.0
    %312 = vmatpush1.xpose.msra.mxu0 0.0
    %313 = vmatprep.subr.mxu0 0.0
    %314 = vmatpush1.xpose.msra.mxu0 0.0
    %315 = vmatprep.subr.mxu0 0.0
    %316 = vmatpush1.xpose.msra.mxu0 0.0
    %317 = vmatprep.subr.mxu0 0.0
    %318 = vmatpush1.xpose.msra.mxu0 0.0
    %319 = vmatprep.subr.mxu0 0.0
    %320 = vmatpush1.xpose.msra.mxu0 0.0
    %321 = vmatprep.subr.mxu0 0.0
    %322 = vmatpush1.xpose.msra.mxu0 0.0
    %323 = vmatprep.subr.mxu0 0.0
    %324 = vmatpush1.xpose.msra.mxu0 0.0
    %325 = vmatprep.subr.mxu0 0.0
    %326 = vmatpush1.xpose.msra.mxu0 0.0
    %327 = vmatprep.subr.mxu0 0.0
    %328 = vmatpush1.xpose.msra.mxu0 0.0
    %329 = vmatprep.subr.mxu0 0.0
    %330 = vmatpush1.xpose.msra.mxu0 0.0
    %331 = vmatprep.subr.mxu0 0.0
    %332 = vmatpush1.xpose.msra.mxu0 0.0
    %333 = vmatprep.subr.mxu0 0.0
    %334 = vmatpush1.xpose.msra.mxu0 0.0
    %335 = vmatprep.subr.mxu0 0.0
    %336 = vmatpush1.xpose.msra.mxu0 0.0
    %337 = vmatprep.subr.mxu0 0.0
    %338 = vmatpush1.xpose.msra.mxu0 0.0
    %339 = vmatprep.mubr.f32.mxu0 0.0
    %340 = vmatmul.mubr.f32.gmra.mrb[0].mxu0 %v174
    %v341 = vpop.f32.mrb[0].mxu0
    %v342 = vadd.f32 0.0, %v341
    %v343 = vpop.f32.mrb[0].mxu0
    %344 = vmatprep.mubr.f32.mxu0 0.0
    %345 = vmatmul.mubr.f32.gmra.mrb[0].mxu0 %v177
    %v346 = vpop.f32.mrb[0].mxu0
    %v347 = vadd.f32 0.0, %v346
    %v348 = vpop.f32.mrb[0].mxu0
    %349 = vmatprep.mubr.f32.mxu0 0.0
    %350 = vmatmul.mubr.f32.gmra.mrb[0].mxu0 %v180
    %v351 = vpop.f32.mrb[0].mxu0
    %v352 = vadd.f32 0.0, %v351
    %v353 = vpop.f32.mrb[0].mxu0
    %354 = vmatprep.mubr.f32.mxu0 0.0
    %355 = vmatmul.mubr.f32.gmra.mrb[0].mxu0 %v183
    %v356 = vpop.f32.mrb[0].mxu0
    %v357 = vadd.f32 0.0, %v356
    %v358 = vpop.f32.mrb[0].mxu0
    %359 = vmatprep.mubr.f32.mxu0 0.0
    %360 = vmatmul.mubr.f32.gmra.mrb[0].mxu0 %v186
    %v361 = vpop.f32.mrb[0].mxu0
    %v362 = vadd.f32 0.0, %v361
    %v363 = vpop.f32.mrb[0].mxu0
    %364 = vmatprep.mubr.f32.mxu0 0.0
    %365 = vmatmul.mubr.f32.gmra.mrb[0].mxu0 %v189
    %v366 = vpop.f32.mrb[0].mxu0
    %v367 = vadd.f32 0.0, %v366
    %v368 = vpop.f32.mrb[0].mxu0
    %369 = vmatprep.mubr.f32.mxu0 0.0
    %370 = vmatmul.mubr.f32.gmra.mrb[0].mxu0 %v192
    %v371 = vpop.f32.mrb[0].mxu0
    %v372 = vadd.f32 0.0, %v371
    %v373 = vpop.f32.mrb[0].mxu0
    %374 = vmatprep.mubr.f32.mxu0 0.0
    %375 = vmatmul.mubr.f32.gmra.mrb[0].mxu0 %v195
    %v376 = vpop.f32.mrb[0].mxu0
    %v377 = vadd.f32 0.0, %v376
    %v378 = vpop.f32.mrb[0].mxu0
    %379 = vmatprep.mubr.f32.mxu0 0.0
    %380 = vmatmul.mubr.f32.gmra.mrb[0].mxu0 %v198
    %v381 = vpop.f32.mrb[0].mxu0
    %v382 = vadd.f32 0.0, %v381
    %v383 = vpop.f32.mrb[0].mxu0
    %384 = vmatprep.mubr.f32.mxu0 0.0
    %385 = vmatmul.mubr.f32.gmra.mrb[0].mxu0 %v201
    %v386 = vpop.f32.mrb[0].mxu0
    %v387 = vadd.f32 0.0, %v386
    %v388 = vpop.f32.mrb[0].mxu0
    %389 = vmatprep.mubr.f32.mxu0 0.0
    %390 = vmatmul.mubr.f32.gmra.mrb[0].mxu0 %v204
    %v391 = vpop.f32.mrb[0].mxu0
    %v392 = vadd.f32 0.0, %v391
    %v393 = vpop.f32.mrb[0].mxu0
    %394 = vmatprep.mubr.f32.mxu0 0.0
    %395 = vmatmul.mubr.f32.gmra.mrb[0].mxu0 %v207
    %v396 = vpop.f32.mrb[0].mxu0
    %v397 = vadd.f32 0.0, %v396
    %v398 = vpop.f32.mrb[0].mxu0
    %399 = vmatprep.mubr.f32.mxu0 0.0
    %400 = vmatmul.mubr.f32.gmra.mrb[0].mxu0 %v210
    %v401 = vpop.f32.mrb[0].mxu0
    %v402 = vadd.f32 0.0, %v401
    %v403 = vpop.f32.mrb[0].mxu0
    %404 = vmatprep.mubr.f32.mxu0 0.0
    %405 = vmatmul.mubr.f32.gmra.mrb[0].mxu0 %v213
    %v406 = vpop.f32.mrb[0].mxu0
    %v407 = vadd.f32 0.0, %v406
    %v408 = vpop.f32.mrb[0].mxu0
    %409 = vmatprep.mubr.f32.mxu0 0.0
    %410 = vmatmul.mubr.f32.gmra.mrb[0].mxu0 %v216
    %v411 = vpop.f32.mrb[0].mxu0
    %v412 = vadd.f32 0.0, %v411
    %v413 = vpop.f32.mrb[0].mxu0
    %414 = vmatprep.mubr.f32.mxu0 0.0
    %415 = vmatmul.mubr.f32.gmra.mrb[0].mxu0 %v219
    %v416 = vpop.f32.mrb[0].mxu0
    %v417 = vadd.f32 0.0, %v416
    %v418 = vpop.f32.mrb[0].mxu0
    %419 = vmatprep.mubr.f32.mxu0 0.0
    %420 = vmatmul.mubr.f32.gmra.mrb[0].mxu0 %v222
    %v421 = vpop.f32.mrb[0].mxu0
    %v422 = vadd.f32 0.0, %v421
    %v423 = vpop.f32.mrb[0].mxu0
    %424 = vmatprep.mubr.f32.mxu0 0.0
    %425 = vmatmul.mubr.f32.gmra.mrb[0].mxu0 %v225
    %v426 = vpop.f32.mrb[0].mxu0
    %v427 = vadd.f32 0.0, %v426
    %v428 = vpop.f32.mrb[0].mxu0
    %429 = vmatprep.mubr.f32.mxu0 0.0
    %430 = vmatmul.mubr.f32.gmra.mrb[0].mxu0 %v228
    %v431 = vpop.f32.mrb[0].mxu0
    %v432 = vadd.f32 0.0, %v431
    %v433 = vpop.f32.mrb[0].mxu0
    %434 = vmatprep.mubr.f32.mxu0 0.0
    %435 = vmatmul.mubr.f32.gmra.mrb[0].mxu0 %v231
    %v436 = vpop.f32.mrb[0].mxu0
    %v437 = vadd.f32 0.0, %v436
    %v438 = vpop.f32.mrb[0].mxu0
    %439 = vmatprep.mubr.f32.mxu0 0.0
    %440 = vmatmul.mubr.f32.gmra.mrb[0].mxu0 %v234
    %v441 = vpop.f32.mrb[0].mxu0
    %v442 = vadd.f32 0.0, %v441
    %v443 = vpop.f32.mrb[0].mxu0
    %444 = vmatprep.mubr.f32.mxu0 0.0
    %445 = vmatmul.mubr.f32.gmra.mrb[0].mxu0 %v237
    %v446 = vpop.f32.mrb[0].mxu0
    %v447 = vadd.f32 0.0, %v446
    %v448 = vpop.f32.mrb[0].mxu0
    %449 = vmatprep.mubr.f32.mxu0 0.0
    %450 = vmatmul.mubr.f32.gmra.mrb[0].mxu0 %v240
    %v451 = vpop.f32.mrb[0].mxu0
    %v452 = vadd.f32 0.0, %v451
    %v453 = vpop.f32.mrb[0].mxu0
    %454 = vmatprep.mubr.f32.mxu0 0.0
    %455 = vmatmul.mubr.f32.gmra.mrb[0].mxu0 %v243
    %v456 = vpop.f32.mrb[0].mxu0
    %v457 = vadd.f32 0.0, %v456
    %v458 = vpop.f32.mrb[0].mxu0
    %459 = vmatprep.mubr.f32.mxu0 0.0
    %460 = vmatmul.mubr.f32.gmra.mrb[0].mxu0 %v246
    %v461 = vpop.f32.mrb[0].mxu0
    %v462 = vadd.f32 0.0, %v461
    %v463 = vpop.f32.mrb[0].mxu0
    %464 = vmatprep.mubr.f32.mxu0 0.0
    %465 = vmatmul.mubr.f32.gmra.mrb[0].mxu0 %v249
    %v466 = vpop.f32.mrb[0].mxu0
    %v467 = vadd.f32 0.0, %v466
    %v468 = vpop.f32.mrb[0].mxu0
    %469 = vmatprep.mubr.f32.mxu0 0.0
    %470 = vmatmul.mubr.f32.gmra.mrb[0].mxu0 %v252
    %v471 = vpop.f32.mrb[0].mxu0
    %v472 = vadd.f32 0.0, %v471
    %v473 = vpop.f32.mrb[0].mxu0
    %474 = vmatprep.mubr.f32.mxu0 0.0
    %475 = vmatmul.mubr.f32.gmra.mrb[0].mxu0 %v255
    %v476 = vpop.f32.mrb[0].mxu0
    %v477 = vadd.f32 0.0, %v476
    %v478 = vpop.f32.mrb[0].mxu0
    %479 = vmatprep.mubr.f32.mxu0 0.0
    %480 = vmatmul.mubr.f32.gmra.mrb[0].mxu0 %v258
    %v481 = vpop.f32.mrb[0].mxu0
    %v482 = vadd.f32 0.0, %v481
    %v483 = vpop.f32.mrb[0].mxu0
    %484 = vmatprep.mubr.f32.mxu0 0.0
    %485 = vmatmul.mubr.f32.gmra.mrb[0].mxu0 %v261
    %v486 = vpop.f32.mrb[0].mxu0
    %v487 = vadd.f32 0.0, %v486
    %v488 = vpop.f32.mrb[0].mxu0
    %489 = vmatprep.mubr.f32.mxu0 0.0
    %490 = vmatmul.mubr.f32.gmra.mrb[0].mxu0 %v264
    %v491 = vpop.f32.mrb[0].mxu0
    %v492 = vadd.f32 0.0, %v491
    %v493 = vpop.f32.mrb[0].mxu0
    %494 = vmatprep.mubr.f32.mxu0 0.0
    %495 = vmatmul.mubr.f32.gmra.mrb[0].mxu0 %v267
    %v496 = vpop.f32.mrb[0].mxu0
    %v497 = vadd.f32 0.0, %v496
    %v498 = vpop.f32.mrb[0].mxu0
    %499 = vdwg.mxu0
    %501 = vset.pattern.permute.xlu0 0
    %502 = vperm.xlu0 %501, %v131
    %v503 = vpop.permute.xlu0 %502
    %506 = vset.pattern.permute.xlu0 0
    %507 = vperm.xlu0 %506, %v136
    %v508 = vpop.permute.xlu0 %507
    %v510 = vadd.f32 %v342, %v503
    %v511 = vadd.f32 %v347, %v508
    %v512 = vadd.f32 %v352, %v503
    %v513 = vadd.f32 %v357, %v508
    %v514 = vadd.f32 %v362, %v503
    %v515 = vadd.f32 %v367, %v508
    %v516 = vadd.f32 %v372, %v503
    %v517 = vadd.f32 %v377, %v508
    %v518 = vadd.f32 %v382, %v503
    %v519 = vadd.f32 %v387, %v508
    %v520 = vadd.f32 %v392, %v503
    %v521 = vadd.f32 %v397, %v508
    %v522 = vadd.f32 %v402, %v503
    %v523 = vadd.f32 %v407, %v508
    %v524 = vadd.f32 %v412, %v503
    %v525 = vadd.f32 %v417, %v508
    %v526 = vadd.f32 %v422, %v503
    %v527 = vadd.f32 %v427, %v508
    %v528 = vadd.f32 %v432, %v503
    %v529 = vadd.f32 %v437, %v508
    %v530 = vadd.f32 %v442, %v503
    %v531 = vadd.f32 %v447, %v508
    %v532 = vadd.f32 %v452, %v503
    %v533 = vadd.f32 %v457, %v508
    %v534 = vadd.f32 %v462, %v503
    %v535 = vadd.f32 %v467, %v508
    %v536 = vadd.f32 %v472, %v503
    %v537 = vadd.f32 %v477, %v508
    %v538 = vadd.f32 %v482, %v503
    %v539 = vadd.f32 %v487, %v508
    %v540 = vadd.f32 %v492, %v503
    %v541 = vadd.f32 %v497, %v508
    %v542 = vtanh.pop %v510
    %v543 = vtanh.pop %v511
    %v544 = vtanh.pop %v512
    %v545 = vtanh.pop %v513
    %v546 = vtanh.pop %v514
    %v547 = vtanh.pop %v515
    %v548 = vtanh.pop %v516
    %v549 = vtanh.pop %v517
    %v550 = vtanh.pop %v518
    %v551 = vtanh.pop %v519
    %v552 = vtanh.pop %v520
    %v553 = vtanh.pop %v521
    %v554 = vtanh.pop %v522
    %v555 = vtanh.pop %v523
    %v556 = vtanh.pop %v524
    %v557 = vtanh.pop %v525
    %v558 = vtanh.pop %v526
    %v559 = vtanh.pop %v527
    %v560 = vtanh.pop %v528
    %v561 = vtanh.pop %v529
    %v562 = vtanh.pop %v530
    %v563 = vtanh.pop %v531
    %v564 = vtanh.pop %v532
    %v565 = vtanh.pop %v533
    %v566 = vtanh.pop %v534
    %v567 = vtanh.pop %v535
    %v568 = vtanh.pop %v536
    %v569 = vtanh.pop %v537
    %v570 = vtanh.pop %v538
    %v571 = vtanh.pop %v539
    %v572 = vtanh.pop %v540
    %v573 = vtanh.pop %v541
    %v574 = vld [vmem:[%s4] sm:$0x1]
    %v576 = vsel %vm57, %v574, 0
    %v579 = vsel %vm57, %v542, 0
    %v582 = vsel %vm57, %v543, 0
    %584 = vmatprep.subr.mxu0 0.0
    %585 = vmatpush1.xpose.msra.mxu0 %v579
    %586 = vmatprep.subr.mxu0 0.0
    %587 = vmatpush1.xpose.msra.mxu0 %v582
    %588 = vmatprep.subr.mxu0 0.0
    %589 = vmatpush1.xpose.msra.mxu0 0.0
    %590 = vmatprep.subr.mxu0 0.0
    %591 = vmatpush1.xpose.msra.mxu0 0.0
    %592 = vmatprep.subr.mxu0 0.0
    %593 = vmatpush1.xpose.msra.mxu0 0.0
    %594 = vmatprep.subr.mxu0 0.0
    %595 = vmatpush1.xpose.msra.mxu0 0.0
    %596 = vmatprep.subr.mxu0 0.0
    %597 = vmatpush1.xpose.msra.mxu0 0.0
    %598 = vmatprep.subr.mxu0 0.0
    %599 = vmatpush1.xpose.msra.mxu0 0.0
    %600 = vmatprep.subr.mxu0 0.0
    %601 = vmatpush1.xpose.msra.mxu0 0.0
    %602 = vmatprep.subr.mxu0 0.0
    %603 = vmatpush1.xpose.msra.mxu0 0.0
    %604 = vmatprep.subr.mxu0 0.0
    %605 = vmatpush1.xpose.msra.mxu0 0.0
    %606 = vmatprep.subr.mxu0 0.0
    %607 = vmatpush1.xpose.msra.mxu0 0.0
    %608 = vmatprep.subr.mxu0 0.0
    %609 = vmatpush1.xpose.msra.mxu0 0.0
    %610 = vmatprep.subr.mxu0 0.0
    %611 = vmatpush1.xpose.msra.mxu0 0.0
    %612 = vmatprep.subr.mxu0 0.0
    %613 = vmatpush1.xpose.msra.mxu0 0.0
    %614 = vmatprep.subr.mxu0 0.0
    %615 = vmatpush1.xpose.msra.mxu0 0.0
    %616 = vmatprep.subr.mxu0 0.0
    %617 = vmatpush1.xpose.msra.mxu0 0.0
    %618 = vmatprep.subr.mxu0 0.0
    %619 = vmatpush1.xpose.msra.mxu0 0.0
    %620 = vmatprep.subr.mxu0 0.0
    %621 = vmatpush1.xpose.msra.mxu0 0.0
    %622 = vmatprep.subr.mxu0 0.0
    %623 = vmatpush1.xpose.msra.mxu0 0.0
    %624 = vmatprep.subr.mxu0 0.0
    %625 = vmatpush1.xpose.msra.mxu0 0.0
    %626 = vmatprep.subr.mxu0 0.0
    %627 = vmatpush1.xpose.msra.mxu0 0.0
    %628 = vmatprep.subr.mxu0 0.0
    %629 = vmatpush1.xpose.msra.mxu0 0.0
    %630 = vmatprep.subr.mxu0 0.0
    %631 = vmatpush1.xpose.msra.mxu0 0.0
    %632 = vmatprep.subr.mxu0 0.0
    %633 = vmatpush1.xpose.msra.mxu0 0.0
    %634 = vmatprep.subr.mxu0 0.0
    %635 = vmatpush1.xpose.msra.mxu0 0.0
    %636 = vmatprep.subr.mxu0 0.0
    %637 = vmatpush1.xpose.msra.mxu0 0.0
    %638 = vmatprep.subr.mxu0 0.0
    %639 = vmatpush1.xpose.msra.mxu0 0.0
    %640 = vmatprep.subr.mxu0 0.0
    %641 = vmatpush1.xpose.msra.mxu0 0.0
    %642 = vmatprep.subr.mxu0 0.0
    %643 = vmatpush1.xpose.msra.mxu0 0.0
    %644 = vmatprep.subr.mxu0 0.0
    %645 = vmatpush1.xpose.msra.mxu0 0.0
    %646 = vmatprep.subr.mxu0 0.0
    %647 = vmatpush1.xpose.msra.mxu0 0.0
    %648 = vmatprep.mubr.f32.mxu0 0.0
    %649 = vmatmul.mubr.f32.gmra.mrb[0].mxu0 %v576
    %v650 = vpop.f32.mrb[0].mxu0
    %v651 = vadd.f32 0.0, %v650
    %v652 = vpop.f32.mrb[0].mxu0
    %653 = vdwg.mxu0
    %v655 = vsel %vm57, %v544, 0
    %v658 = vsel %vm57, %v545, 0
    %660 = vmatprep.subr.mxu0 0.0
    %661 = vmatpush1.xpose.msra.mxu0 %v655
    %662 = vmatprep.subr.mxu0 0.0
    %663 = vmatpush1.xpose.msra.mxu0 %v658
    %664 = vmatprep.subr.mxu0 0.0
    %665 = vmatpush1.xpose.msra.mxu0 0.0
    %666 = vmatprep.subr.mxu0 0.0
    %667 = vmatpush1.xpose.msra.mxu0 0.0
    %668 = vmatprep.subr.mxu0 0.0
    %669 = vmatpush1.xpose.msra.mxu0 0.0
    %670 = vmatprep.subr.mxu0 0.0
    %671 = vmatpush1.xpose.msra.mxu0 0.0
    %672 = vmatprep.subr.mxu0 0.0
    %673 = vmatpush1.xpose.msra.mxu0 0.0
    %674 = vmatprep.subr.mxu0 0.0
    %675 = vmatpush1.xpose.msra.mxu0 0.0
    %676 = vmatprep.subr.mxu0 0.0
    %677 = vmatpush1.xpose.msra.mxu0 0.0
    %678 = vmatprep.subr.mxu0 0.0
    %679 = vmatpush1.xpose.msra.mxu0 0.0
    %680 = vmatprep.subr.mxu0 0.0
    %681 = vmatpush1.xpose.msra.mxu0 0.0
    %682 = vmatprep.subr.mxu0 0.0
    %683 = vmatpush1.xpose.msra.mxu0 0.0
    %684 = vmatprep.subr.mxu0 0.0
    %685 = vmatpush1.xpose.msra.mxu0 0.0
    %686 = vmatprep.subr.mxu0 0.0
    %687 = vmatpush1.xpose.msra.mxu0 0.0
    %688 = vmatprep.subr.mxu0 0.0
    %689 = vmatpush1.xpose.msra.mxu0 0.0
    %690 = vmatprep.subr.mxu0 0.0
    %691 = vmatpush1.xpose.msra.mxu0 0.0
    %692 = vmatprep.subr.mxu0 0.0
    %693 = vmatpush1.xpose.msra.mxu0 0.0
    %694 = vmatprep.subr.mxu0 0.0
    %695 = vmatpush1.xpose.msra.mxu0 0.0
    %696 = vmatprep.subr.mxu0 0.0
    %697 = vmatpush1.xpose.msra.mxu0 0.0
    %698 = vmatprep.subr.mxu0 0.0
    %699 = vmatpush1.xpose.msra.mxu0 0.0
    %700 = vmatprep.subr.mxu0 0.0
    %701 = vmatpush1.xpose.msra.mxu0 0.0
    %702 = vmatprep.subr.mxu0 0.0
    %703 = vmatpush1.xpose.msra.mxu0 0.0
    %704 = vmatprep.subr.mxu0 0.0
    %705 = vmatpush1.xpose.msra.mxu0 0.0
    %706 = vmatprep.subr.mxu0 0.0
    %707 = vmatpush1.xpose.msra.mxu0 0.0
    %708 = vmatprep.subr.mxu0 0.0
    %709 = vmatpush1.xpose.msra.mxu0 0.0
    %710 = vmatprep.subr.mxu0 0.0
    %711 = vmatpush1.xpose.msra.mxu0 0.0
    %712 = vmatprep.subr.mxu0 0.0
    %713 = vmatpush1.xpose.msra.mxu0 0.0
    %714 = vmatprep.subr.mxu0 0.0
    %715 = vmatpush1.xpose.msra.mxu0 0.0
    %716 = vmatprep.subr.mxu0 0.0
    %717 = vmatpush1.xpose.msra.mxu0 0.0
    %718 = vmatprep.subr.mxu0 0.0
    %719 = vmatpush1.xpose.msra.mxu0 0.0
    %720 = vmatprep.subr.mxu0 0.0
    %721 = vmatpush1.xpose.msra.mxu0 0.0
    %722 = vmatprep.subr.mxu0 0.0
    %723 = vmatpush1.xpose.msra.mxu0 0.0
    %724 = vmatprep.mubr.f32.mxu0 0.0
    %725 = vmatmul.mubr.f32.gmra.mrb[0].mxu0 %v576
    %v726 = vpop.f32.mrb[0].mxu0
    %v727 = vadd.f32 0.0, %v726
    %v728 = vpop.f32.mrb[0].mxu0
    %729 = vdwg.mxu0
    %v731 = vsel %vm57, %v546, 0
    %v734 = vsel %vm57, %v547, 0
    %736 = vmatprep.subr.mxu0 0.0
    %737 = vmatpush1.xpose.msra.mxu0 %v731
    %738 = vmatprep.subr.mxu0 0.0
    %739 = vmatpush1.xpose.msra.mxu0 %v734
    %740 = vmatprep.subr.mxu0 0.0
    %741 = vmatpush1.xpose.msra.mxu0 0.0
    %742 = vmatprep.subr.mxu0 0.0
    %743 = vmatpush1.xpose.msra.mxu0 0.0
    %744 = vmatprep.subr.mxu0 0.0
    %745 = vmatpush1.xpose.msra.mxu0 0.0
    %746 = vmatprep.subr.mxu0 0.0
    %747 = vmatpush1.xpose.msra.mxu0 0.0
    %748 = vmatprep.subr.mxu0 0.0
    %749 = vmatpush1.xpose.msra.mxu0 0.0
    %750 = vmatprep.subr.mxu0 0.0
    %751 = vmatpush1.xpose.msra.mxu0 0.0
    %752 = vmatprep.subr.mxu0 0.0
    %753 = vmatpush1.xpose.msra.mxu0 0.0
    %754 = vmatprep.subr.mxu0 0.0
    %755 = vmatpush1.xpose.msra.mxu0 0.0
    %756 = vmatprep.subr.mxu0 0.0
    %757 = vmatpush1.xpose.msra.mxu0 0.0
    %758 = vmatprep.subr.mxu0 0.0
    %759 = vmatpush1.xpose.msra.mxu0 0.0
    %760 = vmatprep.subr.mxu0 0.0
    %761 = vmatpush1.xpose.msra.mxu0 0.0
    %762 = vmatprep.subr.mxu0 0.0
    %763 = vmatpush1.xpose.msra.mxu0 0.0
    %764 = vmatprep.subr.mxu0 0.0
    %765 = vmatpush1.xpose.msra.mxu0 0.0
    %766 = vmatprep.subr.mxu0 0.0
    %767 = vmatpush1.xpose.msra.mxu0 0.0
    %768 = vmatprep.subr.mxu0 0.0
    %769 = vmatpush1.xpose.msra.mxu0 0.0
    %770 = vmatprep.subr.mxu0 0.0
    %771 = vmatpush1.xpose.msra.mxu0 0.0
    %772 = vmatprep.subr.mxu0 0.0
    %773 = vmatpush1.xpose.msra.mxu0 0.0
    %774 = vmatprep.subr.mxu0 0.0
    %775 = vmatpush1.xpose.msra.mxu0 0.0
    %776 = vmatprep.subr.mxu0 0.0
    %777 = vmatpush1.xpose.msra.mxu0 0.0
    %778 = vmatprep.subr.mxu0 0.0
    %779 = vmatpush1.xpose.msra.mxu0 0.0
    %780 = vmatprep.subr.mxu0 0.0
    %781 = vmatpush1.xpose.msra.mxu0 0.0
    %782 = vmatprep.subr.mxu0 0.0
    %783 = vmatpush1.xpose.msra.mxu0 0.0
    %784 = vmatprep.subr.mxu0 0.0
    %785 = vmatpush1.xpose.msra.mxu0 0.0
    %786 = vmatprep.subr.mxu0 0.0
    %787 = vmatpush1.xpose.msra.mxu0 0.0
    %788 = vmatprep.subr.mxu0 0.0
    %789 = vmatpush1.xpose.msra.mxu0 0.0
    %790 = vmatprep.subr.mxu0 0.0
    %791 = vmatpush1.xpose.msra.mxu0 0.0
    %792 = vmatprep.subr.mxu0 0.0
    %793 = vmatpush1.xpose.msra.mxu0 0.0
    %794 = vmatprep.subr.mxu0 0.0
    %795 = vmatpush1.xpose.msra.mxu0 0.0
    %796 = vmatprep.subr.mxu0 0.0
    %797 = vmatpush1.xpose.msra.mxu0 0.0
    %798 = vmatprep.subr.mxu0 0.0
    %799 = vmatpush1.xpose.msra.mxu0 0.0
    %800 = vmatprep.mubr.f32.mxu0 0.0
    %801 = vmatmul.mubr.f32.gmra.mrb[0].mxu0 %v576
    %v802 = vpop.f32.mrb[0].mxu0
    %v803 = vadd.f32 0.0, %v802
    %v804 = vpop.f32.mrb[0].mxu0
    %805 = vdwg.mxu0
    %v807 = vsel %vm57, %v548, 0
    %v810 = vsel %vm57, %v549, 0
    %812 = vmatprep.subr.mxu0 0.0
    %813 = vmatpush1.xpose.msra.mxu0 %v807
    %814 = vmatprep.subr.mxu0 0.0
    %815 = vmatpush1.xpose.msra.mxu0 %v810
    %816 = vmatprep.subr.mxu0 0.0
    %817 = vmatpush1.xpose.msra.mxu0 0.0
    %818 = vmatprep.subr.mxu0 0.0
    %819 = vmatpush1.xpose.msra.mxu0 0.0
    %820 = vmatprep.subr.mxu0 0.0
    %821 = vmatpush1.xpose.msra.mxu0 0.0
    %822 = vmatprep.subr.mxu0 0.0
    %823 = vmatpush1.xpose.msra.mxu0 0.0
    %824 = vmatprep.subr.mxu0 0.0
    %825 = vmatpush1.xpose.msra.mxu0 0.0
    %826 = vmatprep.subr.mxu0 0.0
    %827 = vmatpush1.xpose.msra.mxu0 0.0
    %828 = vmatprep.subr.mxu0 0.0
    %829 = vmatpush1.xpose.msra.mxu0 0.0
    %830 = vmatprep.subr.mxu0 0.0
    %831 = vmatpush1.xpose.msra.mxu0 0.0
    %832 = vmatprep.subr.mxu0 0.0
    %833 = vmatpush1.xpose.msra.mxu0 0.0
    %834 = vmatprep.subr.mxu0 0.0
    %835 = vmatpush1.xpose.msra.mxu0 0.0
    %836 = vmatprep.subr.mxu0 0.0
    %837 = vmatpush1.xpose.msra.mxu0 0.0
    %838 = vmatprep.subr.mxu0 0.0
    %839 = vmatpush1.xpose.msra.mxu0 0.0
    %840 = vmatprep.subr.mxu0 0.0
    %841 = vmatpush1.xpose.msra.mxu0 0.0
    %842 = vmatprep.subr.mxu0 0.0
    %843 = vmatpush1.xpose.msra.mxu0 0.0
    %844 = vmatprep.subr.mxu0 0.0
    %845 = vmatpush1.xpose.msra.mxu0 0.0
    %846 = vmatprep.subr.mxu0 0.0
    %847 = vmatpush1.xpose.msra.mxu0 0.0
    %848 = vmatprep.subr.mxu0 0.0
    %849 = vmatpush1.xpose.msra.mxu0 0.0
    %850 = vmatprep.subr.mxu0 0.0
    %851 = vmatpush1.xpose.msra.mxu0 0.0
    %852 = vmatprep.subr.mxu0 0.0
    %853 = vmatpush1.xpose.msra.mxu0 0.0
    %854 = vmatprep.subr.mxu0 0.0
    %855 = vmatpush1.xpose.msra.mxu0 0.0
    %856 = vmatprep.subr.mxu0 0.0
    %857 = vmatpush1.xpose.msra.mxu0 0.0
    %858 = vmatprep.subr.mxu0 0.0
    %859 = vmatpush1.xpose.msra.mxu0 0.0
    %860 = vmatprep.subr.mxu0 0.0
    %861 = vmatpush1.xpose.msra.mxu0 0.0
    %862 = vmatprep.subr.mxu0 0.0
    %863 = vmatpush1.xpose.msra.mxu0 0.0
    %864 = vmatprep.subr.mxu0 0.0
    %865 = vmatpush1.xpose.msra.mxu0 0.0
    %866 = vmatprep.subr.mxu0 0.0
    %867 = vmatpush1.xpose.msra.mxu0 0.0
    %868 = vmatprep.subr.mxu0 0.0
    %869 = vmatpush1.xpose.msra.mxu0 0.0
    %870 = vmatprep.subr.mxu0 0.0
    %871 = vmatpush1.xpose.msra.mxu0 0.0
    %872 = vmatprep.subr.mxu0 0.0
    %873 = vmatpush1.xpose.msra.mxu0 0.0
    %874 = vmatprep.subr.mxu0 0.0
    %875 = vmatpush1.xpose.msra.mxu0 0.0
    %876 = vmatprep.mubr.f32.mxu0 0.0
    %877 = vmatmul.mubr.f32.gmra.mrb[0].mxu0 %v576
    %v878 = vpop.f32.mrb[0].mxu0
    %v879 = vadd.f32 0.0, %v878
    %v880 = vpop.f32.mrb[0].mxu0
    %881 = vdwg.mxu0
    %v883 = vsel %vm57, %v550, 0
    %v886 = vsel %vm57, %v551, 0
    %888 = vmatprep.subr.mxu0 0.0
    %889 = vmatpush1.xpose.msra.mxu0 %v883
    %890 = vmatprep.subr.mxu0 0.0
    %891 = vmatpush1.xpose.msra.mxu0 %v886
    %892 = vmatprep.subr.mxu0 0.0
    %893 = vmatpush1.xpose.msra.mxu0 0.0
    %894 = vmatprep.subr.mxu0 0.0
    %895 = vmatpush1.xpose.msra.mxu0 0.0
    %896 = vmatprep.subr.mxu0 0.0
    %897 = vmatpush1.xpose.msra.mxu0 0.0
    %898 = vmatprep.subr.mxu0 0.0
    %899 = vmatpush1.xpose.msra.mxu0 0.0
    %900 = vmatprep.subr.mxu0 0.0
    %901 = vmatpush1.xpose.msra.mxu0 0.0
    %902 = vmatprep.subr.mxu0 0.0
    %903 = vmatpush1.xpose.msra.mxu0 0.0
    %904 = vmatprep.subr.mxu0 0.0
    %905 = vmatpush1.xpose.msra.mxu0 0.0
    %906 = vmatprep.subr.mxu0 0.0
    %907 = vmatpush1.xpose.msra.mxu0 0.0
    %908 = vmatprep.subr.mxu0 0.0
    %909 = vmatpush1.xpose.msra.mxu0 0.0
    %910 = vmatprep.subr.mxu0 0.0
    %911 = vmatpush1.xpose.msra.mxu0 0.0
    %912 = vmatprep.subr.mxu0 0.0
    %913 = vmatpush1.xpose.msra.mxu0 0.0
    %914 = vmatprep.subr.mxu0 0.0
    %915 = vmatpush1.xpose.msra.mxu0 0.0
    %916 = vmatprep.subr.mxu0 0.0
    %917 = vmatpush1.xpose.msra.mxu0 0.0
    %918 = vmatprep.subr.mxu0 0.0
    %919 = vmatpush1.xpose.msra.mxu0 0.0
    %920 = vmatprep.subr.mxu0 0.0
    %921 = vmatpush1.xpose.msra.mxu0 0.0
    %922 = vmatprep.subr.mxu0 0.0
    %923 = vmatpush1.xpose.msra.mxu0 0.0
    %924 = vmatprep.subr.mxu0 0.0
    %925 = vmatpush1.xpose.msra.mxu0 0.0
    %926 = vmatprep.subr.mxu0 0.0
    %927 = vmatpush1.xpose.msra.mxu0 0.0
    %928 = vmatprep.subr.mxu0 0.0
    %929 = vmatpush1.xpose.msra.mxu0 0.0
    %930 = vmatprep.subr.mxu0 0.0
    %931 = vmatpush1.xpose.msra.mxu0 0.0
    %932 = vmatprep.subr.mxu0 0.0
    %933 = vmatpush1.xpose.msra.mxu0 0.0
    %934 = vmatprep.subr.mxu0 0.0
    %935 = vmatpush1.xpose.msra.mxu0 0.0
    %936 = vmatprep.subr.mxu0 0.0
    %937 = vmatpush1.xpose.msra.mxu0 0.0
    %938 = vmatprep.subr.mxu0 0.0
    %939 = vmatpush1.xpose.msra.mxu0 0.0
    %940 = vmatprep.subr.mxu0 0.0
    %941 = vmatpush1.xpose.msra.mxu0 0.0
    %942 = vmatprep.subr.mxu0 0.0
    %943 = vmatpush1.xpose.msra.mxu0 0.0
    %944 = vmatprep.subr.mxu0 0.0
    %945 = vmatpush1.xpose.msra.mxu0 0.0
    %946 = vmatprep.subr.mxu0 0.0
    %947 = vmatpush1.xpose.msra.mxu0 0.0
    %948 = vmatprep.subr.mxu0 0.0
    %949 = vmatpush1.xpose.msra.mxu0 0.0
    %950 = vmatprep.subr.mxu0 0.0
    %951 = vmatpush1.xpose.msra.mxu0 0.0
    %952 = vmatprep.mubr.f32.mxu0 0.0
    %953 = vmatmul.mubr.f32.gmra.mrb[0].mxu0 %v576
    %v954 = vpop.f32.mrb[0].mxu0
    %v955 = vadd.f32 0.0, %v954
    %v956 = vpop.f32.mrb[0].mxu0
    %957 = vdwg.mxu0
    %v959 = vsel %vm57, %v552, 0
    %v962 = vsel %vm57, %v553, 0
    %964 = vmatprep.subr.mxu0 0.0
    %965 = vmatpush1.xpose.msra.mxu0 %v959
    %966 = vmatprep.subr.mxu0 0.0
    %967 = vmatpush1.xpose.msra.mxu0 %v962
    %968 = vmatprep.subr.mxu0 0.0
    %969 = vmatpush1.xpose.msra.mxu0 0.0
    %970 = vmatprep.subr.mxu0 0.0
    %971 = vmatpush1.xpose.msra.mxu0 0.0
    %972 = vmatprep.subr.mxu0 0.0
    %973 = vmatpush1.xpose.msra.mxu0 0.0
    %974 = vmatprep.subr.mxu0 0.0
    %975 = vmatpush1.xpose.msra.mxu0 0.0
    %976 = vmatprep.subr.mxu0 0.0
    %977 = vmatpush1.xpose.msra.mxu0 0.0
    %978 = vmatprep.subr.mxu0 0.0
    %979 = vmatpush1.xpose.msra.mxu0 0.0
    %980 = vmatprep.subr.mxu0 0.0
    %981 = vmatpush1.xpose.msra.mxu0 0.0
    %982 = vmatprep.subr.mxu0 0.0
    %983 = vmatpush1.xpose.msra.mxu0 0.0
    %984 = vmatprep.subr.mxu0 0.0
    %985 = vmatpush1.xpose.msra.mxu0 0.0
    %986 = vmatprep.subr.mxu0 0.0
    %987 = vmatpush1.xpose.msra.mxu0 0.0
    %988 = vmatprep.subr.mxu0 0.0
    %989 = vmatpush1.xpose.msra.mxu0 0.0
    %990 = vmatprep.subr.mxu0 0.0
    %991 = vmatpush1.xpose.msra.mxu0 0.0
    %992 = vmatprep.subr.mxu0 0.0
    %993 = vmatpush1.xpose.msra.mxu0 0.0
    %994 = vmatprep.subr.mxu0 0.0
    %995 = vmatpush1.xpose.msra.mxu0 0.0
    %996 = vmatprep.subr.mxu0 0.0
    %997 = vmatpush1.xpose.msra.mxu0 0.0
    %998 = vmatprep.subr.mxu0 0.0
    %999 = vmatpush1.xpose.msra.mxu0 0.0
    %1000 = vmatprep.subr.mxu0 0.0
    %1001 = vmatpush1.xpose.msra.mxu0 0.0
    %1002 = vmatprep.subr.mxu0 0.0
    %1003 = vmatpush1.xpose.msra.mxu0 0.0
    %1004 = vmatprep.subr.mxu0 0.0
    %1005 = vmatpush1.xpose.msra.mxu0 0.0
    %1006 = vmatprep.subr.mxu0 0.0
    %1007 = vmatpush1.xpose.msra.mxu0 0.0
    %1008 = vmatprep.subr.mxu0 0.0
    %1009 = vmatpush1.xpose.msra.mxu0 0.0
    %1010 = vmatprep.subr.mxu0 0.0
    %1011 = vmatpush1.xpose.msra.mxu0 0.0
    %1012 = vmatprep.subr.mxu0 0.0
    %1013 = vmatpush1.xpose.msra.mxu0 0.0
    %1014 = vmatprep.subr.mxu0 0.0
    %1015 = vmatpush1.xpose.msra.mxu0 0.0
    %1016 = vmatprep.subr.mxu0 0.0
    %1017 = vmatpush1.xpose.msra.mxu0 0.0
    %1018 = vmatprep.subr.mxu0 0.0
    %1019 = vmatpush1.xpose.msra.mxu0 0.0
    %1020 = vmatprep.subr.mxu0 0.0
    %1021 = vmatpush1.xpose.msra.mxu0 0.0
    %1022 = vmatprep.subr.mxu0 0.0
    %1023 = vmatpush1.xpose.msra.mxu0 0.0
    %1024 = vmatprep.subr.mxu0 0.0
    %1025 = vmatpush1.xpose.msra.mxu0 0.0
    %1026 = vmatprep.subr.mxu0 0.0
    %1027 = vmatpush1.xpose.msra.mxu0 0.0
    %1028 = vmatprep.mubr.f32.mxu0 0.0
    %1029 = vmatmul.mubr.f32.gmra.mrb[0].mxu0 %v576
    %v1030 = vpop.f32.mrb[0].mxu0
    %v1031 = vadd.f32 0.0, %v1030
    %v1032 = vpop.f32.mrb[0].mxu0
    %1033 = vdwg.mxu0
    %v1035 = vsel %vm57, %v554, 0
    %v1038 = vsel %vm57, %v555, 0
    %1040 = vmatprep.subr.mxu0 0.0
    %1041 = vmatpush1.xpose.msra.mxu0 %v1035
    %1042 = vmatprep.subr.mxu0 0.0
    %1043 = vmatpush1.xpose.msra.mxu0 %v1038
    %1044 = vmatprep.subr.mxu0 0.0
    %1045 = vmatpush1.xpose.msra.mxu0 0.0
    %1046 = vmatprep.subr.mxu0 0.0
    %1047 = vmatpush1.xpose.msra.mxu0 0.0
    %1048 = vmatprep.subr.mxu0 0.0
    %1049 = vmatpush1.xpose.msra.mxu0 0.0
    %1050 = vmatprep.subr.mxu0 0.0
    %1051 = vmatpush1.xpose.msra.mxu0 0.0
    %1052 = vmatprep.subr.mxu0 0.0
    %1053 = vmatpush1.xpose.msra.mxu0 0.0
    %1054 = vmatprep.subr.mxu0 0.0
    %1055 = vmatpush1.xpose.msra.mxu0 0.0
    %1056 = vmatprep.subr.mxu0 0.0
    %1057 = vmatpush1.xpose.msra.mxu0 0.0
    %1058 = vmatprep.subr.mxu0 0.0
    %1059 = vmatpush1.xpose.msra.mxu0 0.0
    %1060 = vmatprep.subr.mxu0 0.0
    %1061 = vmatpush1.xpose.msra.mxu0 0.0
    %1062 = vmatprep.subr.mxu0 0.0
    %1063 = vmatpush1.xpose.msra.mxu0 0.0
    %1064 = vmatprep.subr.mxu0 0.0
    %1065 = vmatpush1.xpose.msra.mxu0 0.0
    %1066 = vmatprep.subr.mxu0 0.0
    %1067 = vmatpush1.xpose.msra.mxu0 0.0
    %1068 = vmatprep.subr.mxu0 0.0
    %1069 = vmatpush1.xpose.msra.mxu0 0.0
    %1070 = vmatprep.subr.mxu0 0.0
    %1071 = vmatpush1.xpose.msra.mxu0 0.0
    %1072 = vmatprep.subr.mxu0 0.0
    %1073 = vmatpush1.xpose.msra.mxu0 0.0
    %1074 = vmatprep.subr.mxu0 0.0
    %1075 = vmatpush1.xpose.msra.mxu0 0.0
    %1076 = vmatprep.subr.mxu0 0.0
    %1077 = vmatpush1.xpose.msra.mxu0 0.0
    %1078 = vmatprep.subr.mxu0 0.0
    %1079 = vmatpush1.xpose.msra.mxu0 0.0
    %1080 = vmatprep.subr.mxu0 0.0
    %1081 = vmatpush1.xpose.msra.mxu0 0.0
    %1082 = vmatprep.subr.mxu0 0.0
    %1083 = vmatpush1.xpose.msra.mxu0 0.0
    %1084 = vmatprep.subr.mxu0 0.0
    %1085 = vmatpush1.xpose.msra.mxu0 0.0
    %1086 = vmatprep.subr.mxu0 0.0
    %1087 = vmatpush1.xpose.msra.mxu0 0.0
    %1088 = vmatprep.subr.mxu0 0.0
    %1089 = vmatpush1.xpose.msra.mxu0 0.0
    %1090 = vmatprep.subr.mxu0 0.0
    %1091 = vmatpush1.xpose.msra.mxu0 0.0
    %1092 = vmatprep.subr.mxu0 0.0
    %1093 = vmatpush1.xpose.msra.mxu0 0.0
    %1094 = vmatprep.subr.mxu0 0.0
    %1095 = vmatpush1.xpose.msra.mxu0 0.0
    %1096 = vmatprep.subr.mxu0 0.0
    %1097 = vmatpush1.xpose.msra.mxu0 0.0
    %1098 = vmatprep.subr.mxu0 0.0
    %1099 = vmatpush1.xpose.msra.mxu0 0.0
    %1100 = vmatprep.subr.mxu0 0.0
    %1101 = vmatpush1.xpose.msra.mxu0 0.0
    %1102 = vmatprep.subr.mxu0 0.0
    %1103 = vmatpush1.xpose.msra.mxu0 0.0
    %1104 = vmatprep.mubr.f32.mxu0 0.0
    %1105 = vmatmul.mubr.f32.gmra.mrb[0].mxu0 %v576
    %v1106 = vpop.f32.mrb[0].mxu0
    %v1107 = vadd.f32 0.0, %v1106
    %v1108 = vpop.f32.mrb[0].mxu0
    %1109 = vdwg.mxu0
    %v1111 = vsel %vm57, %v556, 0
    %v1114 = vsel %vm57, %v557, 0
    %1116 = vmatprep.subr.mxu0 0.0
    %1117 = vmatpush1.xpose.msra.mxu0 %v1111
    %1118 = vmatprep.subr.mxu0 0.0
    %1119 = vmatpush1.xpose.msra.mxu0 %v1114
    %1120 = vmatprep.subr.mxu0 0.0
    %1121 = vmatpush1.xpose.msra.mxu0 0.0
    %1122 = vmatprep.subr.mxu0 0.0
    %1123 = vmatpush1.xpose.msra.mxu0 0.0
    %1124 = vmatprep.subr.mxu0 0.0
    %1125 = vmatpush1.xpose.msra.mxu0 0.0
    %1126 = vmatprep.subr.mxu0 0.0
    %1127 = vmatpush1.xpose.msra.mxu0 0.0
    %1128 = vmatprep.subr.mxu0 0.0
    %1129 = vmatpush1.xpose.msra.mxu0 0.0
    %1130 = vmatprep.subr.mxu0 0.0
    %1131 = vmatpush1.xpose.msra.mxu0 0.0
    %1132 = vmatprep.subr.mxu0 0.0
    %1133 = vmatpush1.xpose.msra.mxu0 0.0
    %1134 = vmatprep.subr.mxu0 0.0
    %1135 = vmatpush1.xpose.msra.mxu0 0.0
    %1136 = vmatprep.subr.mxu0 0.0
    %1137 = vmatpush1.xpose.msra.mxu0 0.0
    %1138 = vmatprep.subr.mxu0 0.0
    %1139 = vmatpush1.xpose.msra.mxu0 0.0
    %1140 = vmatprep.subr.mxu0 0.0
    %1141 = vmatpush1.xpose.msra.mxu0 0.0
    %1142 = vmatprep.subr.mxu0 0.0
    %1143 = vmatpush1.xpose.msra.mxu0 0.0
    %1144 = vmatprep.subr.mxu0 0.0
    %1145 = vmatpush1.xpose.msra.mxu0 0.0
    %1146 = vmatprep.subr.mxu0 0.0
    %1147 = vmatpush1.xpose.msra.mxu0 0.0
    %1148 = vmatprep.subr.mxu0 0.0
    %1149 = vmatpush1.xpose.msra.mxu0 0.0
    %1150 = vmatprep.subr.mxu0 0.0
    %1151 = vmatpush1.xpose.msra.mxu0 0.0
    %1152 = vmatprep.subr.mxu0 0.0
    %1153 = vmatpush1.xpose.msra.mxu0 0.0
    %1154 = vmatprep.subr.mxu0 0.0
    %1155 = vmatpush1.xpose.msra.mxu0 0.0
    %1156 = vmatprep.subr.mxu0 0.0
    %1157 = vmatpush1.xpose.msra.mxu0 0.0
    %1158 = vmatprep.subr.mxu0 0.0
    %1159 = vmatpush1.xpose.msra.mxu0 0.0
    %1160 = vmatprep.subr.mxu0 0.0
    %1161 = vmatpush1.xpose.msra.mxu0 0.0
    %1162 = vmatprep.subr.mxu0 0.0
    %1163 = vmatpush1.xpose.msra.mxu0 0.0
    %1164 = vmatprep.subr.mxu0 0.0
    %1165 = vmatpush1.xpose.msra.mxu0 0.0
    %1166 = vmatprep.subr.mxu0 0.0
    %1167 = vmatpush1.xpose.msra.mxu0 0.0
    %1168 = vmatprep.subr.mxu0 0.0
    %1169 = vmatpush1.xpose.msra.mxu0 0.0
    %1170 = vmatprep.subr.mxu0 0.0
    %1171 = vmatpush1.xpose.msra.mxu0 0.0
    %1172 = vmatprep.subr.mxu0 0.0
    %1173 = vmatpush1.xpose.msra.mxu0 0.0
    %1174 = vmatprep.subr.mxu0 0.0
    %1175 = vmatpush1.xpose.msra.mxu0 0.0
    %1176 = vmatprep.subr.mxu0 0.0
    %1177 = vmatpush1.xpose.msra.mxu0 0.0
    %1178 = vmatprep.subr.mxu0 0.0
    %1179 = vmatpush1.xpose.msra.mxu0 0.0
    %1180 = vmatprep.mubr.f32.mxu0 0.0
    %1181 = vmatmul.mubr.f32.gmra.mrb[0].mxu0 %v576
    %v1182 = vpop.f32.mrb[0].mxu0
    %v1183 = vadd.f32 0.0, %v1182
    %v1184 = vpop.f32.mrb[0].mxu0
    %1185 = vdwg.mxu0
    %v1187 = vsel %vm57, %v558, 0
    %v1190 = vsel %vm57, %v559, 0
    %1192 = vmatprep.subr.mxu0 0.0
    %1193 = vmatpush1.xpose.msra.mxu0 %v1187
    %1194 = vmatprep.subr.mxu0 0.0
    %1195 = vmatpush1.xpose.msra.mxu0 %v1190
    %1196 = vmatprep.subr.mxu0 0.0
    %1197 = vmatpush1.xpose.msra.mxu0 0.0
    %1198 = vmatprep.subr.mxu0 0.0
    %1199 = vmatpush1.xpose.msra.mxu0 0.0
    %1200 = vmatprep.subr.mxu0 0.0
    %1201 = vmatpush1.xpose.msra.mxu0 0.0
    %1202 = vmatprep.subr.mxu0 0.0
    %1203 = vmatpush1.xpose.msra.mxu0 0.0
    %1204 = vmatprep.subr.mxu0 0.0
    %1205 = vmatpush1.xpose.msra.mxu0 0.0
    %1206 = vmatprep.subr.mxu0 0.0
    %1207 = vmatpush1.xpose.msra.mxu0 0.0
    %1208 = vmatprep.subr.mxu0 0.0
    %1209 = vmatpush1.xpose.msra.mxu0 0.0
    %1210 = vmatprep.subr.mxu0 0.0
    %1211 = vmatpush1.xpose.msra.mxu0 0.0
    %1212 = vmatprep.subr.mxu0 0.0
    %1213 = vmatpush1.xpose.msra.mxu0 0.0
    %1214 = vmatprep.subr.mxu0 0.0
    %1215 = vmatpush1.xpose.msra.mxu0 0.0
    %1216 = vmatprep.subr.mxu0 0.0
    %1217 = vmatpush1.xpose.msra.mxu0 0.0
    %1218 = vmatprep.subr.mxu0 0.0
    %1219 = vmatpush1.xpose.msra.mxu0 0.0
    %1220 = vmatprep.subr.mxu0 0.0
    %1221 = vmatpush1.xpose.msra.mxu0 0.0
    %1222 = vmatprep.subr.mxu0 0.0
    %1223 = vmatpush1.xpose.msra.mxu0 0.0
    %1224 = vmatprep.subr.mxu0 0.0
    %1225 = vmatpush1.xpose.msra.mxu0 0.0
    %1226 = vmatprep.subr.mxu0 0.0
    %1227 = vmatpush1.xpose.msra.mxu0 0.0
    %1228 = vmatprep.subr.mxu0 0.0
    %1229 = vmatpush1.xpose.msra.mxu0 0.0
    %1230 = vmatprep.subr.mxu0 0.0
    %1231 = vmatpush1.xpose.msra.mxu0 0.0
    %1232 = vmatprep.subr.mxu0 0.0
    %1233 = vmatpush1.xpose.msra.mxu0 0.0
    %1234 = vmatprep.subr.mxu0 0.0
    %1235 = vmatpush1.xpose.msra.mxu0 0.0
    %1236 = vmatprep.subr.mxu0 0.0
    %1237 = vmatpush1.xpose.msra.mxu0 0.0
    %1238 = vmatprep.subr.mxu0 0.0
    %1239 = vmatpush1.xpose.msra.mxu0 0.0
    %1240 = vmatprep.subr.mxu0 0.0
    %1241 = vmatpush1.xpose.msra.mxu0 0.0
    %1242 = vmatprep.subr.mxu0 0.0
    %1243 = vmatpush1.xpose.msra.mxu0 0.0
    %1244 = vmatprep.subr.mxu0 0.0
    %1245 = vmatpush1.xpose.msra.mxu0 0.0
    %1246 = vmatprep.subr.mxu0 0.0
    %1247 = vmatpush1.xpose.msra.mxu0 0.0
    %1248 = vmatprep.subr.mxu0 0.0
    %1249 = vmatpush1.xpose.msra.mxu0 0.0
    %1250 = vmatprep.subr.mxu0 0.0
    %1251 = vmatpush1.xpose.msra.mxu0 0.0
    %1252 = vmatprep.subr.mxu0 0.0
    %1253 = vmatpush1.xpose.msra.mxu0 0.0
    %1254 = vmatprep.subr.mxu0 0.0
    %1255 = vmatpush1.xpose.msra.mxu0 0.0
    %1256 = vmatprep.mubr.f32.mxu0 0.0
    %1257 = vmatmul.mubr.f32.gmra.mrb[0].mxu0 %v576
    %v1258 = vpop.f32.mrb[0].mxu0
    %v1259 = vadd.f32 0.0, %v1258
    %v1260 = vpop.f32.mrb[0].mxu0
    %1261 = vdwg.mxu0
    %v1263 = vsel %vm57, %v560, 0
    %v1266 = vsel %vm57, %v561, 0
    %1268 = vmatprep.subr.mxu0 0.0
    %1269 = vmatpush1.xpose.msra.mxu0 %v1263
    %1270 = vmatprep.subr.mxu0 0.0
    %1271 = vmatpush1.xpose.msra.mxu0 %v1266
    %1272 = vmatprep.subr.mxu0 0.0
    %1273 = vmatpush1.xpose.msra.mxu0 0.0
    %1274 = vmatprep.subr.mxu0 0.0
    %1275 = vmatpush1.xpose.msra.mxu0 0.0
    %1276 = vmatprep.subr.mxu0 0.0
    %1277 = vmatpush1.xpose.msra.mxu0 0.0
    %1278 = vmatprep.subr.mxu0 0.0
    %1279 = vmatpush1.xpose.msra.mxu0 0.0
    %1280 = vmatprep.subr.mxu0 0.0
    %1281 = vmatpush1.xpose.msra.mxu0 0.0
    %1282 = vmatprep.subr.mxu0 0.0
    %1283 = vmatpush1.xpose.msra.mxu0 0.0
    %1284 = vmatprep.subr.mxu0 0.0
    %1285 = vmatpush1.xpose.msra.mxu0 0.0
    %1286 = vmatprep.subr.mxu0 0.0
    %1287 = vmatpush1.xpose.msra.mxu0 0.0
    %1288 = vmatprep.subr.mxu0 0.0
    %1289 = vmatpush1.xpose.msra.mxu0 0.0
    %1290 = vmatprep.subr.mxu0 0.0
    %1291 = vmatpush1.xpose.msra.mxu0 0.0
    %1292 = vmatprep.subr.mxu0 0.0
    %1293 = vmatpush1.xpose.msra.mxu0 0.0
    %1294 = vmatprep.subr.mxu0 0.0
    %1295 = vmatpush1.xpose.msra.mxu0 0.0
    %1296 = vmatprep.subr.mxu0 0.0
    %1297 = vmatpush1.xpose.msra.mxu0 0.0
    %1298 = vmatprep.subr.mxu0 0.0
    %1299 = vmatpush1.xpose.msra.mxu0 0.0
    %1300 = vmatprep.subr.mxu0 0.0
    %1301 = vmatpush1.xpose.msra.mxu0 0.0
    %1302 = vmatprep.subr.mxu0 0.0
    %1303 = vmatpush1.xpose.msra.mxu0 0.0
    %1304 = vmatprep.subr.mxu0 0.0
    %1305 = vmatpush1.xpose.msra.mxu0 0.0
    %1306 = vmatprep.subr.mxu0 0.0
    %1307 = vmatpush1.xpose.msra.mxu0 0.0
    %1308 = vmatprep.subr.mxu0 0.0
    %1309 = vmatpush1.xpose.msra.mxu0 0.0
    %1310 = vmatprep.subr.mxu0 0.0
    %1311 = vmatpush1.xpose.msra.mxu0 0.0
    %1312 = vmatprep.subr.mxu0 0.0
    %1313 = vmatpush1.xpose.msra.mxu0 0.0
    %1314 = vmatprep.subr.mxu0 0.0
    %1315 = vmatpush1.xpose.msra.mxu0 0.0
    %1316 = vmatprep.subr.mxu0 0.0
    %1317 = vmatpush1.xpose.msra.mxu0 0.0
    %1318 = vmatprep.subr.mxu0 0.0
    %1319 = vmatpush1.xpose.msra.mxu0 0.0
    %1320 = vmatprep.subr.mxu0 0.0
    %1321 = vmatpush1.xpose.msra.mxu0 0.0
    %1322 = vmatprep.subr.mxu0 0.0
    %1323 = vmatpush1.xpose.msra.mxu0 0.0
    %1324 = vmatprep.subr.mxu0 0.0
    %1325 = vmatpush1.xpose.msra.mxu0 0.0
    %1326 = vmatprep.subr.mxu0 0.0
    %1327 = vmatpush1.xpose.msra.mxu0 0.0
    %1328 = vmatprep.subr.mxu0 0.0
    %1329 = vmatpush1.xpose.msra.mxu0 0.0
    %1330 = vmatprep.subr.mxu0 0.0
    %1331 = vmatpush1.xpose.msra.mxu0 0.0
    %1332 = vmatprep.mubr.f32.mxu0 0.0
    %1333 = vmatmul.mubr.f32.gmra.mrb[0].mxu0 %v576
    %v1334 = vpop.f32.mrb[0].mxu0
    %v1335 = vadd.f32 0.0, %v1334
    %v1336 = vpop.f32.mrb[0].mxu0
    %1337 = vdwg.mxu0
    %v1339 = vsel %vm57, %v562, 0
    %v1342 = vsel %vm57, %v563, 0
    %1344 = vmatprep.subr.mxu0 0.0
    %1345 = vmatpush1.xpose.msra.mxu0 %v1339
    %1346 = vmatprep.subr.mxu0 0.0
    %1347 = vmatpush1.xpose.msra.mxu0 %v1342
    %1348 = vmatprep.subr.mxu0 0.0
    %1349 = vmatpush1.xpose.msra.mxu0 0.0
    %1350 = vmatprep.subr.mxu0 0.0
    %1351 = vmatpush1.xpose.msra.mxu0 0.0
    %1352 = vmatprep.subr.mxu0 0.0
    %1353 = vmatpush1.xpose.msra.mxu0 0.0
    %1354 = vmatprep.subr.mxu0 0.0
    %1355 = vmatpush1.xpose.msra.mxu0 0.0
    %1356 = vmatprep.subr.mxu0 0.0
    %1357 = vmatpush1.xpose.msra.mxu0 0.0
    %1358 = vmatprep.subr.mxu0 0.0
    %1359 = vmatpush1.xpose.msra.mxu0 0.0
    %1360 = vmatprep.subr.mxu0 0.0
    %1361 = vmatpush1.xpose.msra.mxu0 0.0
    %1362 = vmatprep.subr.mxu0 0.0
    %1363 = vmatpush1.xpose.msra.mxu0 0.0
    %1364 = vmatprep.subr.mxu0 0.0
    %1365 = vmatpush1.xpose.msra.mxu0 0.0
    %1366 = vmatprep.subr.mxu0 0.0
    %1367 = vmatpush1.xpose.msra.mxu0 0.0
    %1368 = vmatprep.subr.mxu0 0.0
    %1369 = vmatpush1.xpose.msra.mxu0 0.0
    %1370 = vmatprep.subr.mxu0 0.0
    %1371 = vmatpush1.xpose.msra.mxu0 0.0
    %1372 = vmatprep.subr.mxu0 0.0
    %1373 = vmatpush1.xpose.msra.mxu0 0.0
    %1374 = vmatprep.subr.mxu0 0.0
    %1375 = vmatpush1.xpose.msra.mxu0 0.0
    %1376 = vmatprep.subr.mxu0 0.0
    %1377 = vmatpush1.xpose.msra.mxu0 0.0
    %1378 = vmatprep.subr.mxu0 0.0
    %1379 = vmatpush1.xpose.msra.mxu0 0.0
    %1380 = vmatprep.subr.mxu0 0.0
    %1381 = vmatpush1.xpose.msra.mxu0 0.0
    %1382 = vmatprep.subr.mxu0 0.0
    %1383 = vmatpush1.xpose.msra.mxu0 0.0
    %1384 = vmatprep.subr.mxu0 0.0
    %1385 = vmatpush1.xpose.msra.mxu0 0.0
    %1386 = vmatprep.subr.mxu0 0.0
    %1387 = vmatpush1.xpose.msra.mxu0 0.0
    %1388 = vmatprep.subr.mxu0 0.0
    %1389 = vmatpush1.xpose.msra.mxu0 0.0
    %1390 = vmatprep.subr.mxu0 0.0
    %1391 = vmatpush1.xpose.msra.mxu0 0.0
    %1392 = vmatprep.subr.mxu0 0.0
    %1393 = vmatpush1.xpose.msra.mxu0 0.0
    %1394 = vmatprep.subr.mxu0 0.0
    %1395 = vmatpush1.xpose.msra.mxu0 0.0
    %1396 = vmatprep.subr.mxu0 0.0
    %1397 = vmatpush1.xpose.msra.mxu0 0.0
    %1398 = vmatprep.subr.mxu0 0.0
    %1399 = vmatpush1.xpose.msra.mxu0 0.0
    %1400 = vmatprep.subr.mxu0 0.0
    %1401 = vmatpush1.xpose.msra.mxu0 0.0
    %1402 = vmatprep.subr.mxu0 0.0
    %1403 = vmatpush1.xpose.msra.mxu0 0.0
    %1404 = vmatprep.subr.mxu0 0.0
    %1405 = vmatpush1.xpose.msra.mxu0 0.0
    %1406 = vmatprep.subr.mxu0 0.0
    %1407 = vmatpush1.xpose.msra.mxu0 0.0
    %1408 = vmatprep.mubr.f32.mxu0 0.0
    %1409 = vmatmul.mubr.f32.gmra.mrb[0].mxu0 %v576
    %v1410 = vpop.f32.mrb[0].mxu0
    %v1411 = vadd.f32 0.0, %v1410
    %v1412 = vpop.f32.mrb[0].mxu0
    %1413 = vdwg.mxu0
    %v1415 = vsel %vm57, %v564, 0
    %v1418 = vsel %vm57, %v565, 0
    %1420 = vmatprep.subr.mxu0 0.0
    %1421 = vmatpush1.xpose.msra.mxu0 %v1415
    %1422 = vmatprep.subr.mxu0 0.0
    %1423 = vmatpush1.xpose.msra.mxu0 %v1418
    %1424 = vmatprep.subr.mxu0 0.0
    %1425 = vmatpush1.xpose.msra.mxu0 0.0
    %1426 = vmatprep.subr.mxu0 0.0
    %1427 = vmatpush1.xpose.msra.mxu0 0.0
    %1428 = vmatprep.subr.mxu0 0.0
    %1429 = vmatpush1.xpose.msra.mxu0 0.0
    %1430 = vmatprep.subr.mxu0 0.0
    %1431 = vmatpush1.xpose.msra.mxu0 0.0
    %1432 = vmatprep.subr.mxu0 0.0
    %1433 = vmatpush1.xpose.msra.mxu0 0.0
    %1434 = vmatprep.subr.mxu0 0.0
    %1435 = vmatpush1.xpose.msra.mxu0 0.0
    %1436 = vmatprep.subr.mxu0 0.0
    %1437 = vmatpush1.xpose.msra.mxu0 0.0
    %1438 = vmatprep.subr.mxu0 0.0
    %1439 = vmatpush1.xpose.msra.mxu0 0.0
    %1440 = vmatprep.subr.mxu0 0.0
    %1441 = vmatpush1.xpose.msra.mxu0 0.0
    %1442 = vmatprep.subr.mxu0 0.0
    %1443 = vmatpush1.xpose.msra.mxu0 0.0
    %1444 = vmatprep.subr.mxu0 0.0
    %1445 = vmatpush1.xpose.msra.mxu0 0.0
    %1446 = vmatprep.subr.mxu0 0.0
    %1447 = vmatpush1.xpose.msra.mxu0 0.0
    %1448 = vmatprep.subr.mxu0 0.0
    %1449 = vmatpush1.xpose.msra.mxu0 0.0
    %1450 = vmatprep.subr.mxu0 0.0
    %1451 = vmatpush1.xpose.msra.mxu0 0.0
    %1452 = vmatprep.subr.mxu0 0.0
    %1453 = vmatpush1.xpose.msra.mxu0 0.0
    %1454 = vmatprep.subr.mxu0 0.0
    %1455 = vmatpush1.xpose.msra.mxu0 0.0
    %1456 = vmatprep.subr.mxu0 0.0
    %1457 = vmatpush1.xpose.msra.mxu0 0.0
    %1458 = vmatprep.subr.mxu0 0.0
    %1459 = vmatpush1.xpose.msra.mxu0 0.0
    %1460 = vmatprep.subr.mxu0 0.0
    %1461 = vmatpush1.xpose.msra.mxu0 0.0
    %1462 = vmatprep.subr.mxu0 0.0
    %1463 = vmatpush1.xpose.msra.mxu0 0.0
    %1464 = vmatprep.subr.mxu0 0.0
    %1465 = vmatpush1.xpose.msra.mxu0 0.0
    %1466 = vmatprep.subr.mxu0 0.0
    %1467 = vmatpush1.xpose.msra.mxu0 0.0
    %1468 = vmatprep.subr.mxu0 0.0
    %1469 = vmatpush1.xpose.msra.mxu0 0.0
    %1470 = vmatprep.subr.mxu0 0.0
    %1471 = vmatpush1.xpose.msra.mxu0 0.0
    %1472 = vmatprep.subr.mxu0 0.0
    %1473 = vmatpush1.xpose.msra.mxu0 0.0
    %1474 = vmatprep.subr.mxu0 0.0
    %1475 = vmatpush1.xpose.msra.mxu0 0.0
    %1476 = vmatprep.subr.mxu0 0.0
    %1477 = vmatpush1.xpose.msra.mxu0 0.0
    %1478 = vmatprep.subr.mxu0 0.0
    %1479 = vmatpush1.xpose.msra.mxu0 0.0
    %1480 = vmatprep.subr.mxu0 0.0
    %1481 = vmatpush1.xpose.msra.mxu0 0.0
    %1482 = vmatprep.subr.mxu0 0.0
    %1483 = vmatpush1.xpose.msra.mxu0 0.0
    %1484 = vmatprep.mubr.f32.mxu0 0.0
    %1485 = vmatmul.mubr.f32.gmra.mrb[0].mxu0 %v576
    %v1486 = vpop.f32.mrb[0].mxu0
    %v1487 = vadd.f32 0.0, %v1486
    %v1488 = vpop.f32.mrb[0].mxu0
    %1489 = vdwg.mxu0
    %v1491 = vsel %vm57, %v566, 0
    %v1494 = vsel %vm57, %v567, 0
    %1496 = vmatprep.subr.mxu0 0.0
    %1497 = vmatpush1.xpose.msra.mxu0 %v1491
    %1498 = vmatprep.subr.mxu0 0.0
    %1499 = vmatpush1.xpose.msra.mxu0 %v1494
    %1500 = vmatprep.subr.mxu0 0.0
    %1501 = vmatpush1.xpose.msra.mxu0 0.0
    %1502 = vmatprep.subr.mxu0 0.0
    %1503 = vmatpush1.xpose.msra.mxu0 0.0
    %1504 = vmatprep.subr.mxu0 0.0
    %1505 = vmatpush1.xpose.msra.mxu0 0.0
    %1506 = vmatprep.subr.mxu0 0.0
    %1507 = vmatpush1.xpose.msra.mxu0 0.0
    %1508 = vmatprep.subr.mxu0 0.0
    %1509 = vmatpush1.xpose.msra.mxu0 0.0
    %1510 = vmatprep.subr.mxu0 0.0
    %1511 = vmatpush1.xpose.msra.mxu0 0.0
    %1512 = vmatprep.subr.mxu0 0.0
    %1513 = vmatpush1.xpose.msra.mxu0 0.0
    %1514 = vmatprep.subr.mxu0 0.0
    %1515 = vmatpush1.xpose.msra.mxu0 0.0
    %1516 = vmatprep.subr.mxu0 0.0
    %1517 = vmatpush1.xpose.msra.mxu0 0.0
    %1518 = vmatprep.subr.mxu0 0.0
    %1519 = vmatpush1.xpose.msra.mxu0 0.0
    %1520 = vmatprep.subr.mxu0 0.0
    %1521 = vmatpush1.xpose.msra.mxu0 0.0
    %1522 = vmatprep.subr.mxu0 0.0
    %1523 = vmatpush1.xpose.msra.mxu0 0.0
    %1524 = vmatprep.subr.mxu0 0.0
    %1525 = vmatpush1.xpose.msra.mxu0 0.0
    %1526 = vmatprep.subr.mxu0 0.0
    %1527 = vmatpush1.xpose.msra.mxu0 0.0
    %1528 = vmatprep.subr.mxu0 0.0
    %1529 = vmatpush1.xpose.msra.mxu0 0.0
    %1530 = vmatprep.subr.mxu0 0.0
    %1531 = vmatpush1.xpose.msra.mxu0 0.0
    %1532 = vmatprep.subr.mxu0 0.0
    %1533 = vmatpush1.xpose.msra.mxu0 0.0
    %1534 = vmatprep.subr.mxu0 0.0
    %1535 = vmatpush1.xpose.msra.mxu0 0.0
    %1536 = vmatprep.subr.mxu0 0.0
    %1537 = vmatpush1.xpose.msra.mxu0 0.0
    %1538 = vmatprep.subr.mxu0 0.0
    %1539 = vmatpush1.xpose.msra.mxu0 0.0
    %1540 = vmatprep.subr.mxu0 0.0
    %1541 = vmatpush1.xpose.msra.mxu0 0.0
    %1542 = vmatprep.subr.mxu0 0.0
    %1543 = vmatpush1.xpose.msra.mxu0 0.0
    %1544 = vmatprep.subr.mxu0 0.0
    %1545 = vmatpush1.xpose.msra.mxu0 0.0
    %1546 = vmatprep.subr.mxu0 0.0
    %1547 = vmatpush1.xpose.msra.mxu0 0.0
    %1548 = vmatprep.subr.mxu0 0.0
    %1549 = vmatpush1.xpose.msra.mxu0 0.0
    %1550 = vmatprep.subr.mxu0 0.0
    %1551 = vmatpush1.xpose.msra.mxu0 0.0
    %1552 = vmatprep.subr.mxu0 0.0
    %1553 = vmatpush1.xpose.msra.mxu0 0.0
    %1554 = vmatprep.subr.mxu0 0.0
    %1555 = vmatpush1.xpose.msra.mxu0 0.0
    %1556 = vmatprep.subr.mxu0 0.0
    %1557 = vmatpush1.xpose.msra.mxu0 0.0
    %1558 = vmatprep.subr.mxu0 0.0
    %1559 = vmatpush1.xpose.msra.mxu0 0.0
    %1560 = vmatprep.mubr.f32.mxu0 0.0
    %1561 = vmatmul.mubr.f32.gmra.mrb[0].mxu0 %v576
    %v1562 = vpop.f32.mrb[0].mxu0
    %v1563 = vadd.f32 0.0, %v1562
    %v1564 = vpop.f32.mrb[0].mxu0
    %1565 = vdwg.mxu0
    %v1567 = vsel %vm57, %v568, 0
    %v1570 = vsel %vm57, %v569, 0
    %1572 = vmatprep.subr.mxu0 0.0
    %1573 = vmatpush1.xpose.msra.mxu0 %v1567
    %1574 = vmatprep.subr.mxu0 0.0
    %1575 = vmatpush1.xpose.msra.mxu0 %v1570
    %1576 = vmatprep.subr.mxu0 0.0
    %1577 = vmatpush1.xpose.msra.mxu0 0.0
    %1578 = vmatprep.subr.mxu0 0.0
    %1579 = vmatpush1.xpose.msra.mxu0 0.0
    %1580 = vmatprep.subr.mxu0 0.0
    %1581 = vmatpush1.xpose.msra.mxu0 0.0
    %1582 = vmatprep.subr.mxu0 0.0
    %1583 = vmatpush1.xpose.msra.mxu0 0.0
    %1584 = vmatprep.subr.mxu0 0.0
    %1585 = vmatpush1.xpose.msra.mxu0 0.0
    %1586 = vmatprep.subr.mxu0 0.0
    %1587 = vmatpush1.xpose.msra.mxu0 0.0
    %1588 = vmatprep.subr.mxu0 0.0
    %1589 = vmatpush1.xpose.msra.mxu0 0.0
    %1590 = vmatprep.subr.mxu0 0.0
    %1591 = vmatpush1.xpose.msra.mxu0 0.0
    %1592 = vmatprep.subr.mxu0 0.0
    %1593 = vmatpush1.xpose.msra.mxu0 0.0
    %1594 = vmatprep.subr.mxu0 0.0
    %1595 = vmatpush1.xpose.msra.mxu0 0.0
    %1596 = vmatprep.subr.mxu0 0.0
    %1597 = vmatpush1.xpose.msra.mxu0 0.0
    %1598 = vmatprep.subr.mxu0 0.0
    %1599 = vmatpush1.xpose.msra.mxu0 0.0
    %1600 = vmatprep.subr.mxu0 0.0
    %1601 = vmatpush1.xpose.msra.mxu0 0.0
    %1602 = vmatprep.subr.mxu0 0.0
    %1603 = vmatpush1.xpose.msra.mxu0 0.0
    %1604 = vmatprep.subr.mxu0 0.0
    %1605 = vmatpush1.xpose.msra.mxu0 0.0
    %1606 = vmatprep.subr.mxu0 0.0
    %1607 = vmatpush1.xpose.msra.mxu0 0.0
    %1608 = vmatprep.subr.mxu0 0.0
    %1609 = vmatpush1.xpose.msra.mxu0 0.0
    %1610 = vmatprep.subr.mxu0 0.0
    %1611 = vmatpush1.xpose.msra.mxu0 0.0
    %1612 = vmatprep.subr.mxu0 0.0
    %1613 = vmatpush1.xpose.msra.mxu0 0.0
    %1614 = vmatprep.subr.mxu0 0.0
    %1615 = vmatpush1.xpose.msra.mxu0 0.0
    %1616 = vmatprep.subr.mxu0 0.0
    %1617 = vmatpush1.xpose.msra.mxu0 0.0
    %1618 = vmatprep.subr.mxu0 0.0
    %1619 = vmatpush1.xpose.msra.mxu0 0.0
    %1620 = vmatprep.subr.mxu0 0.0
    %1621 = vmatpush1.xpose.msra.mxu0 0.0
    %1622 = vmatprep.subr.mxu0 0.0
    %1623 = vmatpush1.xpose.msra.mxu0 0.0
    %1624 = vmatprep.subr.mxu0 0.0
    %1625 = vmatpush1.xpose.msra.mxu0 0.0
    %1626 = vmatprep.subr.mxu0 0.0
    %1627 = vmatpush1.xpose.msra.mxu0 0.0
    %1628 = vmatprep.subr.mxu0 0.0
    %1629 = vmatpush1.xpose.msra.mxu0 0.0
    %1630 = vmatprep.subr.mxu0 0.0
    %1631 = vmatpush1.xpose.msra.mxu0 0.0
    %1632 = vmatprep.subr.mxu0 0.0
    %1633 = vmatpush1.xpose.msra.mxu0 0.0
    %1634 = vmatprep.subr.mxu0 0.0
    %1635 = vmatpush1.xpose.msra.mxu0 0.0
    %1636 = vmatprep.mubr.f32.mxu0 0.0
    %1637 = vmatmul.mubr.f32.gmra.mrb[0].mxu0 %v576
    %v1638 = vpop.f32.mrb[0].mxu0
    %v1639 = vadd.f32 0.0, %v1638
    %v1640 = vpop.f32.mrb[0].mxu0
    %1641 = vdwg.mxu0
    %v1643 = vsel %vm57, %v570, 0
    %v1646 = vsel %vm57, %v571, 0
    %1648 = vmatprep.subr.mxu0 0.0
    %1649 = vmatpush1.xpose.msra.mxu0 %v1643
    %1650 = vmatprep.subr.mxu0 0.0
    %1651 = vmatpush1.xpose.msra.mxu0 %v1646
    %1652 = vmatprep.subr.mxu0 0.0
    %1653 = vmatpush1.xpose.msra.mxu0 0.0
    %1654 = vmatprep.subr.mxu0 0.0
    %1655 = vmatpush1.xpose.msra.mxu0 0.0
    %1656 = vmatprep.subr.mxu0 0.0
    %1657 = vmatpush1.xpose.msra.mxu0 0.0
    %1658 = vmatprep.subr.mxu0 0.0
    %1659 = vmatpush1.xpose.msra.mxu0 0.0
    %1660 = vmatprep.subr.mxu0 0.0
    %1661 = vmatpush1.xpose.msra.mxu0 0.0
    %1662 = vmatprep.subr.mxu0 0.0
    %1663 = vmatpush1.xpose.msra.mxu0 0.0
    %1664 = vmatprep.subr.mxu0 0.0
    %1665 = vmatpush1.xpose.msra.mxu0 0.0
    %1666 = vmatprep.subr.mxu0 0.0
    %1667 = vmatpush1.xpose.msra.mxu0 0.0
    %1668 = vmatprep.subr.mxu0 0.0
    %1669 = vmatpush1.xpose.msra.mxu0 0.0
    %1670 = vmatprep.subr.mxu0 0.0
    %1671 = vmatpush1.xpose.msra.mxu0 0.0
    %1672 = vmatprep.subr.mxu0 0.0
    %1673 = vmatpush1.xpose.msra.mxu0 0.0
    %1674 = vmatprep.subr.mxu0 0.0
    %1675 = vmatpush1.xpose.msra.mxu0 0.0
    %1676 = vmatprep.subr.mxu0 0.0
    %1677 = vmatpush1.xpose.msra.mxu0 0.0
    %1678 = vmatprep.subr.mxu0 0.0
    %1679 = vmatpush1.xpose.msra.mxu0 0.0
    %1680 = vmatprep.subr.mxu0 0.0
    %1681 = vmatpush1.xpose.msra.mxu0 0.0
    %1682 = vmatprep.subr.mxu0 0.0
    %1683 = vmatpush1.xpose.msra.mxu0 0.0
    %1684 = vmatprep.subr.mxu0 0.0
    %1685 = vmatpush1.xpose.msra.mxu0 0.0
    %1686 = vmatprep.subr.mxu0 0.0
    %1687 = vmatpush1.xpose.msra.mxu0 0.0
    %1688 = vmatprep.subr.mxu0 0.0
    %1689 = vmatpush1.xpose.msra.mxu0 0.0
    %1690 = vmatprep.subr.mxu0 0.0
    %1691 = vmatpush1.xpose.msra.mxu0 0.0
    %1692 = vmatprep.subr.mxu0 0.0
    %1693 = vmatpush1.xpose.msra.mxu0 0.0
    %1694 = vmatprep.subr.mxu0 0.0
    %1695 = vmatpush1.xpose.msra.mxu0 0.0
    %1696 = vmatprep.subr.mxu0 0.0
    %1697 = vmatpush1.xpose.msra.mxu0 0.0
    %1698 = vmatprep.subr.mxu0 0.0
    %1699 = vmatpush1.xpose.msra.mxu0 0.0
    %1700 = vmatprep.subr.mxu0 0.0
    %1701 = vmatpush1.xpose.msra.mxu0 0.0
    %1702 = vmatprep.subr.mxu0 0.0
    %1703 = vmatpush1.xpose.msra.mxu0 0.0
    %1704 = vmatprep.subr.mxu0 0.0
    %1705 = vmatpush1.xpose.msra.mxu0 0.0
    %1706 = vmatprep.subr.mxu0 0.0
    %1707 = vmatpush1.xpose.msra.mxu0 0.0
    %1708 = vmatprep.subr.mxu0 0.0
    %1709 = vmatpush1.xpose.msra.mxu0 0.0
    %1710 = vmatprep.subr.mxu0 0.0
    %1711 = vmatpush1.xpose.msra.mxu0 0.0
    %1712 = vmatprep.mubr.f32.mxu0 0.0
    %1713 = vmatmul.mubr.f32.gmra.mrb[0].mxu0 %v576
    %v1714 = vpop.f32.mrb[0].mxu0
    %v1715 = vadd.f32 0.0, %v1714
    %v1716 = vpop.f32.mrb[0].mxu0
    %1717 = vdwg.mxu0
    %v1719 = vsel %vm57, %v572, 0
    %v1722 = vsel %vm57, %v573, 0
    %1724 = vmatprep.subr.mxu0 0.0
    %1725 = vmatpush1.xpose.msra.mxu0 %v1719
    %1726 = vmatprep.subr.mxu0 0.0
    %1727 = vmatpush1.xpose.msra.mxu0 %v1722
    %1728 = vmatprep.subr.mxu0 0.0
    %1729 = vmatpush1.xpose.msra.mxu0 0.0
    %1730 = vmatprep.subr.mxu0 0.0
    %1731 = vmatpush1.xpose.msra.mxu0 0.0
    %1732 = vmatprep.subr.mxu0 0.0
    %1733 = vmatpush1.xpose.msra.mxu0 0.0
    %1734 = vmatprep.subr.mxu0 0.0
    %1735 = vmatpush1.xpose.msra.mxu0 0.0
    %1736 = vmatprep.subr.mxu0 0.0
    %1737 = vmatpush1.xpose.msra.mxu0 0.0
    %1738 = vmatprep.subr.mxu0 0.0
    %1739 = vmatpush1.xpose.msra.mxu0 0.0
    %1740 = vmatprep.subr.mxu0 0.0
    %1741 = vmatpush1.xpose.msra.mxu0 0.0
    %1742 = vmatprep.subr.mxu0 0.0
    %1743 = vmatpush1.xpose.msra.mxu0 0.0
    %1744 = vmatprep.subr.mxu0 0.0
    %1745 = vmatpush1.xpose.msra.mxu0 0.0
    %1746 = vmatprep.subr.mxu0 0.0
    %1747 = vmatpush1.xpose.msra.mxu0 0.0
    %1748 = vmatprep.subr.mxu0 0.0
    %1749 = vmatpush1.xpose.msra.mxu0 0.0
    %1750 = vmatprep.subr.mxu0 0.0
    %1751 = vmatpush1.xpose.msra.mxu0 0.0
    %1752 = vmatprep.subr.mxu0 0.0
    %1753 = vmatpush1.xpose.msra.mxu0 0.0
    %1754 = vmatprep.subr.mxu0 0.0
    %1755 = vmatpush1.xpose.msra.mxu0 0.0
    %1756 = vmatprep.subr.mxu0 0.0
    %1757 = vmatpush1.xpose.msra.mxu0 0.0
    %1758 = vmatprep.subr.mxu0 0.0
    %1759 = vmatpush1.xpose.msra.mxu0 0.0
    %1760 = vmatprep.subr.mxu0 0.0
    %1761 = vmatpush1.xpose.msra.mxu0 0.0
    %1762 = vmatprep.subr.mxu0 0.0
    %1763 = vmatpush1.xpose.msra.mxu0 0.0
    %1764 = vmatprep.subr.mxu0 0.0
    %1765 = vmatpush1.xpose.msra.mxu0 0.0
    %1766 = vmatprep.subr.mxu0 0.0
    %1767 = vmatpush1.xpose.msra.mxu0 0.0
    %1768 = vmatprep.subr.mxu0 0.0
    %1769 = vmatpush1.xpose.msra.mxu0 0.0
    %1770 = vmatprep.subr.mxu0 0.0
    %1771 = vmatpush1.xpose.msra.mxu0 0.0
    %1772 = vmatprep.subr.mxu0 0.0
    %1773 = vmatpush1.xpose.msra.mxu0 0.0
    %1774 = vmatprep.subr.mxu0 0.0
    %1775 = vmatpush1.xpose.msra.mxu0 0.0
    %1776 = vmatprep.subr.mxu0 0.0
    %1777 = vmatpush1.xpose.msra.mxu0 0.0
    %1778 = vmatprep.subr.mxu0 0.0
    %1779 = vmatpush1.xpose.msra.mxu0 0.0
    %1780 = vmatprep.subr.mxu0 0.0
    %1781 = vmatpush1.xpose.msra.mxu0 0.0
    %1782 = vmatprep.subr.mxu0 0.0
    %1783 = vmatpush1.xpose.msra.mxu0 0.0
    %1784 = vmatprep.subr.mxu0 0.0
    %1785 = vmatpush1.xpose.msra.mxu0 0.0
    %1786 = vmatprep.subr.mxu0 0.0
    %1787 = vmatpush1.xpose.msra.mxu0 0.0
    %1788 = vmatprep.mubr.f32.mxu0 0.0
    %1789 = vmatmul.mubr.f32.gmra.mrb[0].mxu0 %v576
    %v1790 = vpop.f32.mrb[0].mxu0
    %v1791 = vadd.f32 0.0, %v1790
    %v1792 = vpop.f32.mrb[0].mxu0
    %1793 = vdwg.mxu0
    %vm1794 = vcmask 122880
    %v1795 = vsel %vm1794, %v651, -inf
    %1796 = vmax.xlane.f32.xlu0 %v1795
    %v1797 = vpop.xlane.xlu0 %1796
    %v1798 = vsel %vm1794, %v727, -inf
    %1799 = vmax.xlane.f32.xlu0 %v1798
    %v1800 = vpop.xlane.xlu0 %1799
    %v1801 = vsel %vm1794, %v803, -inf
    %1802 = vmax.xlane.f32.xlu0 %v1801
    %v1803 = vpop.xlane.xlu0 %1802
    %v1804 = vsel %vm1794, %v879, -inf
    %1805 = vmax.xlane.f32.xlu0 %v1804
    %v1806 = vpop.xlane.xlu0 %1805
    %v1807 = vsel %vm1794, %v955, -inf
    %1808 = vmax.xlane.f32.xlu0 %v1807
    %v1809 = vpop.xlane.xlu0 %1808
    %v1810 = vsel %vm1794, %v1031, -inf
    %1811 = vmax.xlane.f32.xlu0 %v1810
    %v1812 = vpop.xlane.xlu0 %1811
    %v1813 = vsel %vm1794, %v1107, -inf
    %1814 = vmax.xlane.f32.xlu0 %v1813
    %v1815 = vpop.xlane.xlu0 %1814
    %v1816 = vsel %vm1794, %v1183, -inf
    %1817 = vmax.xlane.f32.xlu0 %v1816
    %v1818 = vpop.xlane.xlu0 %1817
    %v1819 = vsel %vm1794, %v1259, -inf
    %1820 = vmax.xlane.f32.xlu0 %v1819
    %v1821 = vpop.xlane.xlu0 %1820
    %v1822 = vsel %vm1794, %v1335, -inf
    %1823 = vmax.xlane.f32.xlu0 %v1822
    %v1824 = vpop.xlane.xlu0 %1823
    %v1825 = vsel %vm1794, %v1411, -inf
    %1826 = vmax.xlane.f32.xlu0 %v1825
    %v1827 = vpop.xlane.xlu0 %1826
    %v1828 = vsel %vm1794, %v1487, -inf
    %1829 = vmax.xlane.f32.xlu0 %v1828
    %v1830 = vpop.xlane.xlu0 %1829
    %v1831 = vsel %vm1794, %v1563, -inf
    %1832 = vmax.xlane.f32.xlu0 %v1831
    %v1833 = vpop.xlane.xlu0 %1832
    %v1834 = vsel %vm1794, %v1639, -inf
    %1835 = vmax.xlane.f32.xlu0 %v1834
    %v1836 = vpop.xlane.xlu0 %1835
    %v1837 = vsel %vm1794, %v1715, -inf
    %1838 = vmax.xlane.f32.xlu0 %v1837
    %v1839 = vpop.xlane.xlu0 %1838
    %v1840 = vsel %vm1794, %v1791, -inf
    %1841 = vmax.xlane.f32.xlu0 %v1840
    %v1842 = vpop.xlane.xlu0 %1841
    %v1843 = vsub.f32 %v651, %v1797
    %v1844 = vsub.f32 %v727, %v1800
    %v1845 = vsub.f32 %v803, %v1803
    %v1846 = vsub.f32 %v879, %v1806
    %v1847 = vsub.f32 %v955, %v1809
    %v1848 = vsub.f32 %v1031, %v1812
    %v1849 = vsub.f32 %v1107, %v1815
    %v1850 = vsub.f32 %v1183, %v1818
    %v1851 = vsub.f32 %v1259, %v1821
    %v1852 = vsub.f32 %v1335, %v1824
    %v1853 = vsub.f32 %v1411, %v1827
    %v1854 = vsub.f32 %v1487, %v1830
    %v1855 = vsub.f32 %v1563, %v1833
    %v1856 = vsub.f32 %v1639, %v1836
    %v1857 = vsub.f32 %v1715, %v1839
    %v1858 = vsub.f32 %v1791, %v1842
    %v1859 = vmul.f32 %v1843, 1.442695
    %v1860 = vpow.pop %v1859
    %v1861 = vmul.f32 %v1844, 1.442695
    %v1862 = vpow.pop %v1861
    %v1863 = vmul.f32 %v1845, 1.442695
    %v1864 = vpow.pop %v1863
    %v1865 = vmul.f32 %v1846, 1.442695
    %v1866 = vpow.pop %v1865
    %v1867 = vmul.f32 %v1847, 1.442695
    %v1868 = vpow.pop %v1867
    %v1869 = vmul.f32 %v1848, 1.442695
    %v1870 = vpow.pop %v1869
    %v1871 = vmul.f32 %v1849, 1.442695
    %v1872 = vpow.pop %v1871
    %v1873 = vmul.f32 %v1850, 1.442695
    %v1874 = vpow.pop %v1873
    %v1875 = vmul.f32 %v1851, 1.442695
    %v1876 = vpow.pop %v1875
    %v1877 = vmul.f32 %v1852, 1.442695
    %v1878 = vpow.pop %v1877
    %v1879 = vmul.f32 %v1853, 1.442695
    %v1880 = vpow.pop %v1879
    %v1881 = vmul.f32 %v1854, 1.442695
    %v1882 = vpow.pop %v1881
    %v1883 = vmul.f32 %v1855, 1.442695
    %v1884 = vpow.pop %v1883
    %v1885 = vmul.f32 %v1856, 1.442695
    %v1886 = vpow.pop %v1885
    %v1887 = vmul.f32 %v1857, 1.442695
    %v1888 = vpow.pop %v1887
    %v1889 = vmul.f32 %v1858, 1.442695
    %v1890 = vpow.pop %v1889
    %v1891 = vsel %vm1794, %v1860, 0.0
    %1892 = vadd.xlane.f32.xlu0 %v1891
    %v1893 = vpop.xlane.xlu0 %1892
    %v1894 = vsel %vm1794, %v1862, 0.0
    %1895 = vadd.xlane.f32.xlu0 %v1894
    %v1896 = vpop.xlane.xlu0 %1895
    %v1897 = vsel %vm1794, %v1864, 0.0
    %1898 = vadd.xlane.f32.xlu0 %v1897
    %v1899 = vpop.xlane.xlu0 %1898
    %v1900 = vsel %vm1794, %v1866, 0.0
    %1901 = vadd.xlane.f32.xlu0 %v1900
    %v1902 = vpop.xlane.xlu0 %1901
    %v1903 = vsel %vm1794, %v1868, 0.0
    %1904 = vadd.xlane.f32.xlu0 %v1903
    %v1905 = vpop.xlane.xlu0 %1904
    %v1906 = vsel %vm1794, %v1870, 0.0
    %1907 = vadd.xlane.f32.xlu0 %v1906
    %v1908 = vpop.xlane.xlu0 %1907
    %v1909 = vsel %vm1794, %v1872, 0.0
    %1910 = vadd.xlane.f32.xlu0 %v1909
    %v1911 = vpop.xlane.xlu0 %1910
    %v1912 = vsel %vm1794, %v1874, 0.0
    %1913 = vadd.xlane.f32.xlu0 %v1912
    %v1914 = vpop.xlane.xlu0 %1913
    %v1915 = vsel %vm1794, %v1876, 0.0
    %1916 = vadd.xlane.f32.xlu0 %v1915
    %v1917 = vpop.xlane.xlu0 %1916
    %v1918 = vsel %vm1794, %v1878, 0.0
    %1919 = vadd.xlane.f32.xlu0 %v1918
    %v1920 = vpop.xlane.xlu0 %1919
    %v1921 = vsel %vm1794, %v1880, 0.0
    %1922 = vadd.xlane.f32.xlu0 %v1921
    %v1923 = vpop.xlane.xlu0 %1922
    %v1924 = vsel %vm1794, %v1882, 0.0
    %1925 = vadd.xlane.f32.xlu0 %v1924
    %v1926 = vpop.xlane.xlu0 %1925
    %v1927 = vsel %vm1794, %v1884, 0.0
    %1928 = vadd.xlane.f32.xlu0 %v1927
    %v1929 = vpop.xlane.xlu0 %1928
    %v1930 = vsel %vm1794, %v1886, 0.0
    %1931 = vadd.xlane.f32.xlu0 %v1930
    %v1932 = vpop.xlane.xlu0 %1931
    %v1933 = vsel %vm1794, %v1888, 0.0
    %1934 = vadd.xlane.f32.xlu0 %v1933
    %v1935 = vpop.xlane.xlu0 %1934
    %v1936 = vsel %vm1794, %v1890, 0.0
    %1937 = vadd.xlane.f32.xlu0 %v1936
    %v1938 = vpop.xlane.xlu0 %1937
    %v1939 = vrcp.pop %v1893
    %v1940 = vrcp.pop %v1896
    %v1941 = vrcp.pop %v1899
    %v1942 = vrcp.pop %v1902
    %v1943 = vrcp.pop %v1905
    %v1944 = vrcp.pop %v1908
    %v1945 = vrcp.pop %v1911
    %v1946 = vrcp.pop %v1914
    %v1947 = vrcp.pop %v1917
    %v1948 = vrcp.pop %v1920
    %v1949 = vrcp.pop %v1923
    %v1950 = vrcp.pop %v1926
    %v1951 = vrcp.pop %v1929
    %v1952 = vrcp.pop %v1932
    %v1953 = vrcp.pop %v1935
    %v1954 = vrcp.pop %v1938
    %v1955 = vmul.f32 %v1893, %v1939
    %v1956 = vmul.f32 %v1896, %v1940
    %v1957 = vmul.f32 %v1899, %v1941
    %v1958 = vmul.f32 %v1902, %v1942
    %v1959 = vmul.f32 %v1905, %v1943
    %v1960 = vmul.f32 %v1908, %v1944
    %v1961 = vmul.f32 %v1911, %v1945
    %v1962 = vmul.f32 %v1914, %v1946
    %v1963 = vmul.f32 %v1917, %v1947
    %v1964 = vmul.f32 %v1920, %v1948
    %v1965 = vmul.f32 %v1923, %v1949
    %v1966 = vmul.f32 %v1926, %v1950
    %v1967 = vmul.f32 %v1929, %v1951
    %v1968 = vmul.f32 %v1932, %v1952
    %v1969 = vmul.f32 %v1935, %v1953
    %v1970 = vmul.f32 %v1938, %v1954
    %v1971 = vsub.f32 2.0, %v1955
    %v1972 = vsub.f32 2.0, %v1956
    %v1973 = vsub.f32 2.0, %v1957
    %v1974 = vsub.f32 2.0, %v1958
    %v1975 = vsub.f32 2.0, %v1959
    %v1976 = vsub.f32 2.0, %v1960
    %v1977 = vsub.f32 2.0, %v1961
    %v1978 = vsub.f32 2.0, %v1962
    %v1979 = vsub.f32 2.0, %v1963
    %v1980 = vsub.f32 2.0, %v1964
    %v1981 = vsub.f32 2.0, %v1965
    %v1982 = vsub.f32 2.0, %v1966
    %v1983 = vsub.f32 2.0, %v1967
    %v1984 = vsub.f32 2.0, %v1968
    %v1985 = vsub.f32 2.0, %v1969
    %v1986 = vsub.f32 2.0, %v1970
    %v1987 = vmul.f32 %v1939, %v1971
    %v1988 = vmul.f32 %v1940, %v1972
    %v1989 = vmul.f32 %v1941, %v1973
    %v1990 = vmul.f32 %v1942, %v1974
    %v1991 = vmul.f32 %v1943, %v1975
    %v1992 = vmul.f32 %v1944, %v1976
    %v1993 = vmul.f32 %v1945, %v1977
    %v1994 = vmul.f32 %v1946, %v1978
    %v1995 = vmul.f32 %v1947, %v1979
    %v1996 = vmul.f32 %v1948, %v1980
    %v1997 = vmul.f32 %v1949, %v1981
    %v1998 = vmul.f32 %v1950, %v1982
    %v1999 = vmul.f32 %v1951, %v1983
    %v2000 = vmul.f32 %v1952, %v1984
    %v2001 = vmul.f32 %v1953, %v1985
    %v2002 = vmul.f32 %v1954, %v1986
    %v2003 = vmul.f32 %v1860, %v1987
    %v2004 = vmul.f32 %v1862, %v1988
    %v2005 = vmul.f32 %v1864, %v1989
    %v2006 = vmul.f32 %v1866, %v1990
    %v2007 = vmul.f32 %v1868, %v1991
    %v2008 = vmul.f32 %v1870, %v1992
    %v2009 = vmul.f32 %v1872, %v1993
    %v2010 = vmul.f32 %v1874, %v1994
    %v2011 = vmul.f32 %v1876, %v1995
    %v2012 = vmul.f32 %v1878, %v1996
    %v2013 = vmul.f32 %v1880, %v1997
    %v2014 = vmul.f32 %v1882, %v1998
    %v2015 = vmul.f32 %v1884, %v1999
    %v2016 = vmul.f32 %v1886, %v2000
    %v2017 = vmul.f32 %v1888, %v2001
    %v2018 = vmul.f32 %v1890, %v2002
    %2019 = vst.msk [vmem:[#allocation2] sm:$0x1] %vm1794, %v2003
    %2020 = vst.msk [vmem:[#allocation2 + $0x1] sm:$0x1] %vm1794, %v2004
    %2021 = vst.msk [vmem:[#allocation2 + $0x2] sm:$0x1] %vm1794, %v2005
    %2022 = vst.msk [vmem:[#allocation2 + $0x3] sm:$0x1] %vm1794, %v2006
    %2023 = vst.msk [vmem:[#allocation2 + $0x4] sm:$0x1] %vm1794, %v2007
    %2024 = vst.msk [vmem:[#allocation2 + $0x5] sm:$0x1] %vm1794, %v2008
    %2025 = vst.msk [vmem:[#allocation2 + $0x6] sm:$0x1] %vm1794, %v2009
    %2026 = vst.msk [vmem:[#allocation2 + $0x7] sm:$0x1] %vm1794, %v2010
    %2027 = vst.msk [vmem:[#allocation2 + $0x8] sm:$0x1] %vm1794, %v2011
    %2028 = vst.msk [vmem:[#allocation2 + $0x9] sm:$0x1] %vm1794, %v2012
    %2029 = vst.msk [vmem:[#allocation2 + $0xa] sm:$0x1] %vm1794, %v2013
    %2030 = vst.msk [vmem:[#allocation2 + $0xb] sm:$0x1] %vm1794, %v2014
    %2031 = vst.msk [vmem:[#allocation2 + $0xc] sm:$0x1] %vm1794, %v2015
    %2032 = vst.msk [vmem:[#allocation2 + $0xd] sm:$0x1] %vm1794, %v2016
    %2033 = vst.msk [vmem:[#allocation2 + $0xe] sm:$0x1] %vm1794, %v2017
    %2034 = vst.msk [vmem:[#allocation2 + $0xf] sm:$0x1] %vm1794, %v2018
    // Predicated region
    $region22: #{tpu_custom_call.1} parent=1 // pred_check
      _
    $region23: #{tpu_custom_call.1} parent=1 // pred_check_branch
      %2036 = sbr.rel (0) target = $region25
    $region24: #{tpu_custom_call.1} parent=1 // pred_region
      %s2038 = ssub.s32 256, 256
      %2039 = vsyncadd [#allocation3], %s2038
      %s2040 = sshll.u32 [#allocation2], 4
      %s2041 = int_to_ptr.vmem [resolvable:$true] %s2040
      %2046 = dma.vmem_to_hbm [thread:$0]  %s2041, 256, %s5, [#allocation3], 16, 16, 1
    $region25: #{tpu_custom_call.1} parent=1 // pred_fallthru
      _
    // Predicated region
    $region26: #{tpu_custom_call.1} parent=1 // pred_check
      _
    $region27: #{tpu_custom_call.1} parent=1 // pred_check_branch
      %2048 = sbr.rel (0) target = $region29
    $region28: #{tpu_custom_call.1} parent=1 // pred_region
      %2049 = dma.done [#allocation3], 256
    $region29: #{tpu_custom_call.1} parent=1 // pred_fallthru
      _
    %2050 = vsyncpa [#allocation3], 1

</llo_original>
